<compile_context>
chip_gen: v7x
topology: tpu7x:2x2x1
jax: 0.10.0
libtpu: 0.0.40
codegen_flags: <defaults>
</compile_context>

<pallas_src>
import functools

import numpy as np
import jax
import jax.numpy as jnp
from jax.experimental import pallas as pl
from jax.experimental.pallas import tpu as pltpu

# Hidden sizes match the PyTorch module: in -> 32 -> 64 -> 128 -> 256 -> 128 -> 64 -> 32 -> out
HIDDEN = (32, 64, 128, 256, 128, 64, 32)


def _round_up(x, m):
    return ((x + m - 1) // m) * m


def mlp_kernel(x_ref, w_ref, b_ref, o_ref, *, layer_pads, n_splits):
    """Fused 8-layer MLP on one batch tile.

    x_ref: [TILE_B, in_pad8]   (f32)  -- raw input tile (cast to bf16 in-kernel)
    w_ref: [8, maxd, maxd]     (bf16) -- zero-padded weight slab, layer i in [:ip_i, :op_i]
    b_ref: [8, 1, maxd]        (f32)  -- zero-padded bias slab
    o_ref: [TILE_B, out_pad]   (f32)  -- lane-dense (128-wide) output tile
    """
    tb = x_ref.shape[0]
    rows = tb // n_splits
    n_layers = len(layer_pads)

    # Split the batch tile into independent row groups so every layer issues
    # n_splits independent MXU matmuls (hides weight-push / MRF drain latency of
    # the serially-dependent small K=N=128 layers).
    hs = [x_ref[s * rows:(s + 1) * rows, :].astype(jnp.bfloat16) for s in range(n_splits)]

    for i, (ip, op) in enumerate(layer_pads):          # static Python unroll: 8 layers
        w = w_ref[i, :ip, :op]                         # static, tile-aligned slab slice
        b = b_ref[i, :, :op]                           # [1, op] f32
        outs = []
        for h in hs:                                   # independent matmuls within a layer
            acc = jnp.dot(h, w, preferred_element_type=jnp.float32)  # bf16 x bf16 -> f32 (MXU)
            outs.append(jnp.maximum(acc + b, 0.0))     # bias + ReLU (ReLU after last layer too,
                                                       # matching the PyTorch forward)
        # TODO(synk): nn.Dropout(0.2) between layers is treated as identity (inference
        # semantics); a training-mode mask would need pltpu.prng_seed / prng_random_bits.
        if i + 1 < n_layers:
            hs = [a.astype(jnp.bfloat16) for a in outs]   # back to bf16 for the next MXU pass
        else:
            for s, a in enumerate(outs):
                o_ref[s * rows:(s + 1) * rows, :] = a.astype(o_ref.dtype)


def pack_params(params, compute_dtype=jnp.bfloat16):
    """Pack per-layer (w[in,out], b[1,out]) into two zero-padded slabs ONCE (host-side)."""
    dims = [int(params[0][0].shape[0])] + [int(w.shape[1]) for w, _ in params]
    n_layers = len(params)
    maxd = max(_round_up(d, 128) for d in dims)
    w_slab = np.zeros((n_layers, maxd, maxd), dtype=np.float32)
    b_slab = np.zeros((n_layers, 1, maxd), dtype=np.float32)
    for i, (w, b) in enumerate(params):
        w_np = np.asarray(w, dtype=np.float32)
        b_np = np.asarray(b, dtype=np.float32).reshape(1, -1)
        w_slab[i, : w_np.shape[0], : w_np.shape[1]] = w_np
        b_slab[i, :, : b_np.shape[1]] = b_np
    return (jnp.asarray(w_slab, dtype=compute_dtype),
            jnp.asarray(b_slab, dtype=jnp.float32),
            tuple(dims))


@functools.partial(jax.jit, static_argnames=("dims", "tile_b", "out_dtype"))
def _mlp_forward_impl(x, w_slab, b_slab, *, dims, tile_b, out_dtype):
    batch, in_dim = x.shape
    n_layers = len(dims) - 1
    maxd = w_slab.shape[1]
    out_dim = dims[-1]

    # Per-boundary feature widths as seen by the kernel (activations are 128-lane padded).
    in_pad8 = _round_up(in_dim, 8)                      # sublane-align layer-0 contraction dim
    act_pads = [in_pad8] + [_round_up(d, 128) for d in dims[1:]]
    layer_pads = tuple(zip(act_pads[:-1], act_pads[1:]))
    out_pad = act_pads[-1]

    # Batch tiling: multiple of 8 sublanes (16 when possible so the kernel can run two
    # independent row chains); large tiles amortize per-grid-step overhead.
    tb = _round_up(min(int(tile_b), _round_up(batch, 8)), 8)
    n_splits = 2 if tb % 16 == 0 else 1
    batch_pad = _round_up(batch, tb)

    # Only pad when strictly necessary -- for typical shapes the raw f32 x feeds the kernel
    # directly (no extra pad/cast HBM round trip).
    x_in = x
    if in_pad8 != in_dim:
        x_in = jnp.pad(x_in, ((0, 0), (0, in_pad8 - in_dim)))
    if batch_pad != batch:
        x_in = jnp.pad(x_in, ((0, batch_pad - batch), (0, 0)))

    grid = (batch_pad // tb,)
    kernel = functools.partial(mlp_kernel, layer_pads=layer_pads, n_splits=n_splits)

    flops = 2 * batch_pad * sum(ip * op for ip, op in layer_pads)
    bytes_accessed = (
        x_in.size * x_in.dtype.itemsize
        + w_slab.size * w_slab.dtype.itemsize
        + b_slab.size * b_slab.dtype.itemsize
        + batch_pad * out_pad * jnp.dtype(out_dtype).itemsize
    )

    out_padded = pl.pallas_call(
        kernel,
        out_shape=jax.ShapeDtypeStruct((batch_pad, out_pad), out_dtype),
        grid_spec=pltpu.PrefetchScalarGridSpec(
            num_scalar_prefetch=0,
            grid=grid,
            in_specs=[
                pl.BlockSpec((tb, in_pad8), lambda i: (i, 0)),               # batch tile of x
                pl.BlockSpec((n_layers, maxd, maxd), lambda i: (0, 0, 0)),   # resident weights
                pl.BlockSpec((n_layers, 1, maxd), lambda i: (0, 0, 0)),      # resident biases
            ],
            out_specs=pl.BlockSpec((tb, out_pad), lambda i: (i, 0)),         # lane-dense out
        ),
        compiler_params=pltpu.CompilerParams(
            # TODO(synk): on v7x verify in the trace that the batch grid shards across both
            # TensorCores; if not, switch this axis to pltpu.CORE_PARALLEL.
            dimension_semantics=("parallel",),
            vmem_limit_bytes=32 * 1024 * 1024,   # guard v5e's 16 MiB default scoped limit
        ),
        cost_estimate=pl.CostEstimate(
            flops=flops, transcendentals=0, bytes_accessed=bytes_accessed
        ),
    )(x_in, w_slab, b_slab)

    return out_padded[:batch, :out_dim]


def mlp_forward(x, packed_params, *, tile_b=1024, out_dtype=jnp.float32):
    """x: [batch, in_dim] float32. packed_params: output of pack_params (cached)."""
    w_slab, b_slab, dims = packed_params
    return _mlp_forward_impl(x, w_slab, b_slab, dims=dims, tile_b=int(tile_b),
                             out_dtype=out_dtype)


def init_params(key, in_dim, out_dim):
    """Deterministic init mimicking nn.Linear's uniform(-1/sqrt(fan_in), 1/sqrt(fan_in))."""
    dims = (in_dim,) + HIDDEN + (out_dim,)
    params = []
    for i in range(len(dims) - 1):
        fan_in, fan_out = dims[i], dims[i + 1]
        key, kw, kb = jax.random.split(key, 3)
        bound = 1.0 / jnp.sqrt(jnp.float32(fan_in))
        # Stored as [in, out] (transposed relative to PyTorch's [out, in]).
        w = jax.random.uniform(kw, (fan_in, fan_out), jnp.float32, -bound, bound)
        b = jax.random.uniform(kb, (1, fan_out), jnp.float32, -bound, bound)
        params.append((w, b))
    return params


if __name__ == "__main__":
    in_dim, out_dim, batch = 16, 10, 64
    key = jax.random.PRNGKey(0)
    key, kx = jax.random.split(key)
    x = jax.random.normal(kx, (batch, in_dim), jnp.float32)
    params = init_params(key, in_dim, out_dim)
    packed = pack_params(params)   # packed once, reused for every forward call

    out = mlp_forward(x, packed)
    jax.block_until_ready(out)

    # Matched-precision pure-JAX reference (bf16 matmuls, f32 accumulate, ReLU after every
    # layer including the last -- exactly the PyTorch forward -- dropout as identity).
    h = x.astype(jnp.bfloat16)
    for idx, (w, b) in enumerate(params):
        acc = jnp.dot(h, w.astype(jnp.bfloat16), preferred_element_type=jnp.float32) + b
        acc = jnp.maximum(acc, 0.0)
        h = acc.astype(jnp.bfloat16) if idx + 1 < len(params) else acc
    ref = h

    assert out.shape == (batch, out_dim)
    assert jnp.allclose(out, ref, atol=1e-2, rtol=1e-2)
    print("KERNEL_OK")
</pallas_src>

<mosaic_0001>
module attributes {stable_mosaic.version = 11 : i64} {
  func.func @mlp_kernel(%arg0: i32, %arg1: memref<64x16xf32, #tpu.memory_space<vmem>>, %arg2: memref<8x256x256xbf16, #tpu.memory_space<vmem>>, %arg3: memref<8x1x256xf32, #tpu.memory_space<vmem>>, %arg4: memref<64x128xf32, #tpu.memory_space<vmem>>) attributes {dimension_semantics = [#tpu.dimension_semantics<parallel>], iteration_bounds = array<i64: 1>, scalar_prefetch = 0 : i64, scratch_operands = 0 : i64, tpu.core_type = #tpu.core_type<tc>, window_params = [{transform_indices = @transform_0, window_bounds = array<i64: 64, 16>}, {pipeline_mode = #tpu.pipeline_mode<synchronous>, transform_indices = @transform_1, window_bounds = array<i64: 8, 256, 256>}, {pipeline_mode = #tpu.pipeline_mode<synchronous>, transform_indices = @transform_2, window_bounds = array<i64: 8, 1, 256>}, {transform_indices = @transform_3, window_bounds = array<i64: 64, 128>}]} {
    %c0 = arith.constant 0 : index
    %c0_0 = arith.constant 0 : index
    %0 = vector.load %arg1[%c0, %c0_0] : memref<64x16xf32, #tpu.memory_space<vmem>>, vector<32x16xf32>
    %1 = arith.truncf %0 : vector<32x16xf32> to vector<32x16xbf16>
    %c32 = arith.constant 32 : index
    %c0_1 = arith.constant 0 : index
    %2 = vector.load %arg1[%c32, %c0_1] : memref<64x16xf32, #tpu.memory_space<vmem>>, vector<32x16xf32>
    %3 = arith.truncf %2 : vector<32x16xf32> to vector<32x16xbf16>
    %c0_2 = arith.constant 0 : index
    %c0_3 = arith.constant 0 : index
    %c0_4 = arith.constant 0 : index
    %4 = vector.load %arg2[%c0_2, %c0_3, %c0_4] : memref<8x256x256xbf16, #tpu.memory_space<vmem>>, vector<1x16x128xbf16>
    %5 = vector.shape_cast %4 : vector<1x16x128xbf16> to vector<16x128xbf16>
    %c0_5 = arith.constant 0 : index
    %c0_6 = arith.constant 0 : index
    %c0_7 = arith.constant 0 : index
    %6 = vector.load %arg3[%c0_5, %c0_6, %c0_7] : memref<8x1x256xf32, #tpu.memory_space<vmem>>, vector<1x1x128xf32>
    %7 = vector.shape_cast %6 : vector<1x1x128xf32> to vector<1x128xf32>
    %cst = arith.constant dense<0.000000e+00> : vector<32x128xf32>
    %8 = tpu.matmul %1, %5, %cst {dimension_numbers = #tpu.dot_dimension_numbers<[1], [0], [0], [1], [0, 0, 1, 1], [], []>} : vector<32x16xbf16>, vector<16x128xbf16>, vector<32x128xf32> -> vector<32x128xf32>
    %9 = vector.broadcast %7 : vector<1x128xf32> to vector<32x128xf32>
    %10 = arith.addf %8, %9 : vector<32x128xf32>
    %cst_8 = arith.constant 0.000000e+00 : f32
    %11 = vector.broadcast %cst_8 : f32 to vector<32x128xf32>
    %12 = arith.maximumf %10, %11 : vector<32x128xf32>
    %cst_9 = arith.constant dense<0.000000e+00> : vector<32x128xf32>
    %13 = tpu.matmul %3, %5, %cst_9 {dimension_numbers = #tpu.dot_dimension_numbers<[1], [0], [0], [1], [0, 0, 1, 1], [], []>} : vector<32x16xbf16>, vector<16x128xbf16>, vector<32x128xf32> -> vector<32x128xf32>
    %14 = vector.broadcast %7 : vector<1x128xf32> to vector<32x128xf32>
    %15 = arith.addf %13, %14 : vector<32x128xf32>
    %cst_10 = arith.constant 0.000000e+00 : f32
    %16 = vector.broadcast %cst_10 : f32 to vector<32x128xf32>
    %17 = arith.maximumf %15, %16 : vector<32x128xf32>
    %18 = arith.truncf %12 : vector<32x128xf32> to vector<32x128xbf16>
    %19 = arith.truncf %17 : vector<32x128xf32> to vector<32x128xbf16>
    %c1 = arith.constant 1 : index
    %c0_11 = arith.constant 0 : index
    %c0_12 = arith.constant 0 : index
    %20 = vector.load %arg2[%c1, %c0_11, %c0_12] : memref<8x256x256xbf16, #tpu.memory_space<vmem>>, vector<1x128x128xbf16>
    %21 = vector.shape_cast %20 : vector<1x128x128xbf16> to vector<128x128xbf16>
    %c1_13 = arith.constant 1 : index
    %c0_14 = arith.constant 0 : index
    %c0_15 = arith.constant 0 : index
    %22 = vector.load %arg3[%c1_13, %c0_14, %c0_15] : memref<8x1x256xf32, #tpu.memory_space<vmem>>, vector<1x1x128xf32>
    %23 = vector.shape_cast %22 : vector<1x1x128xf32> to vector<1x128xf32>
    %cst_16 = arith.constant dense<0.000000e+00> : vector<32x128xf32>
    %24 = tpu.matmul %18, %21, %cst_16 {dimension_numbers = #tpu.dot_dimension_numbers<[1], [0], [0], [1], [0, 0, 1, 1], [], []>} : vector<32x128xbf16>, vector<128x128xbf16>, vector<32x128xf32> -> vector<32x128xf32>
    %25 = vector.broadcast %23 : vector<1x128xf32> to vector<32x128xf32>
    %26 = arith.addf %24, %25 : vector<32x128xf32>
    %cst_17 = arith.constant 0.000000e+00 : f32
    %27 = vector.broadcast %cst_17 : f32 to vector<32x128xf32>
    %28 = arith.maximumf %26, %27 : vector<32x128xf32>
    %cst_18 = arith.constant dense<0.000000e+00> : vector<32x128xf32>
    %29 = tpu.matmul %19, %21, %cst_18 {dimension_numbers = #tpu.dot_dimension_numbers<[1], [0], [0], [1], [0, 0, 1, 1], [], []>} : vector<32x128xbf16>, vector<128x128xbf16>, vector<32x128xf32> -> vector<32x128xf32>
    %30 = vector.broadcast %23 : vector<1x128xf32> to vector<32x128xf32>
    %31 = arith.addf %29, %30 : vector<32x128xf32>
    %cst_19 = arith.constant 0.000000e+00 : f32
    %32 = vector.broadcast %cst_19 : f32 to vector<32x128xf32>
    %33 = arith.maximumf %31, %32 : vector<32x128xf32>
    %34 = arith.truncf %28 : vector<32x128xf32> to vector<32x128xbf16>
    %35 = arith.truncf %33 : vector<32x128xf32> to vector<32x128xbf16>
    %c2 = arith.constant 2 : index
    %c0_20 = arith.constant 0 : index
    %c0_21 = arith.constant 0 : index
    %36 = vector.load %arg2[%c2, %c0_20, %c0_21] : memref<8x256x256xbf16, #tpu.memory_space<vmem>>, vector<1x128x128xbf16>
    %37 = vector.shape_cast %36 : vector<1x128x128xbf16> to vector<128x128xbf16>
    %c2_22 = arith.constant 2 : index
    %c0_23 = arith.constant 0 : index
    %c0_24 = arith.constant 0 : index
    %38 = vector.load %arg3[%c2_22, %c0_23, %c0_24] : memref<8x1x256xf32, #tpu.memory_space<vmem>>, vector<1x1x128xf32>
    %39 = vector.shape_cast %38 : vector<1x1x128xf32> to vector<1x128xf32>
    %cst_25 = arith.constant dense<0.000000e+00> : vector<32x128xf32>
    %40 = tpu.matmul %34, %37, %cst_25 {dimension_numbers = #tpu.dot_dimension_numbers<[1], [0], [0], [1], [0, 0, 1, 1], [], []>} : vector<32x128xbf16>, vector<128x128xbf16>, vector<32x128xf32> -> vector<32x128xf32>
    %41 = vector.broadcast %39 : vector<1x128xf32> to vector<32x128xf32>
    %42 = arith.addf %40, %41 : vector<32x128xf32>
    %cst_26 = arith.constant 0.000000e+00 : f32
    %43 = vector.broadcast %cst_26 : f32 to vector<32x128xf32>
    %44 = arith.maximumf %42, %43 : vector<32x128xf32>
    %cst_27 = arith.constant dense<0.000000e+00> : vector<32x128xf32>
    %45 = tpu.matmul %35, %37, %cst_27 {dimension_numbers = #tpu.dot_dimension_numbers<[1], [0], [0], [1], [0, 0, 1, 1], [], []>} : vector<32x128xbf16>, vector<128x128xbf16>, vector<32x128xf32> -> vector<32x128xf32>
    %46 = vector.broadcast %39 : vector<1x128xf32> to vector<32x128xf32>
    %47 = arith.addf %45, %46 : vector<32x128xf32>
    %cst_28 = arith.constant 0.000000e+00 : f32
    %48 = vector.broadcast %cst_28 : f32 to vector<32x128xf32>
    %49 = arith.maximumf %47, %48 : vector<32x128xf32>
    %50 = arith.truncf %44 : vector<32x128xf32> to vector<32x128xbf16>
    %51 = arith.truncf %49 : vector<32x128xf32> to vector<32x128xbf16>
    %c3 = arith.constant 3 : index
    %c0_29 = arith.constant 0 : index
    %c0_30 = arith.constant 0 : index
    %52 = vector.load %arg2[%c3, %c0_29, %c0_30] : memref<8x256x256xbf16, #tpu.memory_space<vmem>>, vector<1x128x256xbf16>
    %53 = vector.shape_cast %52 : vector<1x128x256xbf16> to vector<128x256xbf16>
    %c3_31 = arith.constant 3 : index
    %c0_32 = arith.constant 0 : index
    %c0_33 = arith.constant 0 : index
    %54 = vector.load %arg3[%c3_31, %c0_32, %c0_33] : memref<8x1x256xf32, #tpu.memory_space<vmem>>, vector<1x1x256xf32>
    %55 = vector.shape_cast %54 : vector<1x1x256xf32> to vector<1x256xf32>
    %cst_34 = arith.constant dense<0.000000e+00> : vector<32x256xf32>
    %56 = tpu.matmul %50, %53, %cst_34 {dimension_numbers = #tpu.dot_dimension_numbers<[1], [0], [0], [1], [0, 0, 1, 1], [], []>} : vector<32x128xbf16>, vector<128x256xbf16>, vector<32x256xf32> -> vector<32x256xf32>
    %57 = vector.broadcast %55 : vector<1x256xf32> to vector<32x256xf32>
    %58 = arith.addf %56, %57 : vector<32x256xf32>
    %cst_35 = arith.constant 0.000000e+00 : f32
    %59 = vector.broadcast %cst_35 : f32 to vector<32x256xf32>
    %60 = arith.maximumf %58, %59 : vector<32x256xf32>
    %cst_36 = arith.constant dense<0.000000e+00> : vector<32x256xf32>
    %61 = tpu.matmul %51, %53, %cst_36 {dimension_numbers = #tpu.dot_dimension_numbers<[1], [0], [0], [1], [0, 0, 1, 1], [], []>} : vector<32x128xbf16>, vector<128x256xbf16>, vector<32x256xf32> -> vector<32x256xf32>
    %62 = vector.broadcast %55 : vector<1x256xf32> to vector<32x256xf32>
    %63 = arith.addf %61, %62 : vector<32x256xf32>
    %cst_37 = arith.constant 0.000000e+00 : f32
    %64 = vector.broadcast %cst_37 : f32 to vector<32x256xf32>
    %65 = arith.maximumf %63, %64 : vector<32x256xf32>
    %66 = arith.truncf %60 : vector<32x256xf32> to vector<32x256xbf16>
    %67 = arith.truncf %65 : vector<32x256xf32> to vector<32x256xbf16>
    %c4 = arith.constant 4 : index
    %c0_38 = arith.constant 0 : index
    %c0_39 = arith.constant 0 : index
    %68 = vector.load %arg2[%c4, %c0_38, %c0_39] : memref<8x256x256xbf16, #tpu.memory_space<vmem>>, vector<1x256x128xbf16>
    %69 = vector.shape_cast %68 : vector<1x256x128xbf16> to vector<256x128xbf16>
    %c4_40 = arith.constant 4 : index
    %c0_41 = arith.constant 0 : index
    %c0_42 = arith.constant 0 : index
    %70 = vector.load %arg3[%c4_40, %c0_41, %c0_42] : memref<8x1x256xf32, #tpu.memory_space<vmem>>, vector<1x1x128xf32>
    %71 = vector.shape_cast %70 : vector<1x1x128xf32> to vector<1x128xf32>
    %cst_43 = arith.constant dense<0.000000e+00> : vector<32x128xf32>
    %72 = tpu.matmul %66, %69, %cst_43 {dimension_numbers = #tpu.dot_dimension_numbers<[1], [0], [0], [1], [0, 0, 1, 1], [], []>} : vector<32x256xbf16>, vector<256x128xbf16>, vector<32x128xf32> -> vector<32x128xf32>
    %73 = vector.broadcast %71 : vector<1x128xf32> to vector<32x128xf32>
    %74 = arith.addf %72, %73 : vector<32x128xf32>
    %cst_44 = arith.constant 0.000000e+00 : f32
    %75 = vector.broadcast %cst_44 : f32 to vector<32x128xf32>
    %76 = arith.maximumf %74, %75 : vector<32x128xf32>
    %cst_45 = arith.constant dense<0.000000e+00> : vector<32x128xf32>
    %77 = tpu.matmul %67, %69, %cst_45 {dimension_numbers = #tpu.dot_dimension_numbers<[1], [0], [0], [1], [0, 0, 1, 1], [], []>} : vector<32x256xbf16>, vector<256x128xbf16>, vector<32x128xf32> -> vector<32x128xf32>
    %78 = vector.broadcast %71 : vector<1x128xf32> to vector<32x128xf32>
    %79 = arith.addf %77, %78 : vector<32x128xf32>
    %cst_46 = arith.constant 0.000000e+00 : f32
    %80 = vector.broadcast %cst_46 : f32 to vector<32x128xf32>
    %81 = arith.maximumf %79, %80 : vector<32x128xf32>
    %82 = arith.truncf %76 : vector<32x128xf32> to vector<32x128xbf16>
    %83 = arith.truncf %81 : vector<32x128xf32> to vector<32x128xbf16>
    %c5 = arith.constant 5 : index
    %c0_47 = arith.constant 0 : index
    %c0_48 = arith.constant 0 : index
    %84 = vector.load %arg2[%c5, %c0_47, %c0_48] : memref<8x256x256xbf16, #tpu.memory_space<vmem>>, vector<1x128x128xbf16>
    %85 = vector.shape_cast %84 : vector<1x128x128xbf16> to vector<128x128xbf16>
    %c5_49 = arith.constant 5 : index
    %c0_50 = arith.constant 0 : index
    %c0_51 = arith.constant 0 : index
    %86 = vector.load %arg3[%c5_49, %c0_50, %c0_51] : memref<8x1x256xf32, #tpu.memory_space<vmem>>, vector<1x1x128xf32>
    %87 = vector.shape_cast %86 : vector<1x1x128xf32> to vector<1x128xf32>
    %cst_52 = arith.constant dense<0.000000e+00> : vector<32x128xf32>
    %88 = tpu.matmul %82, %85, %cst_52 {dimension_numbers = #tpu.dot_dimension_numbers<[1], [0], [0], [1], [0, 0, 1, 1], [], []>} : vector<32x128xbf16>, vector<128x128xbf16>, vector<32x128xf32> -> vector<32x128xf32>
    %89 = vector.broadcast %87 : vector<1x128xf32> to vector<32x128xf32>
    %90 = arith.addf %88, %89 : vector<32x128xf32>
    %cst_53 = arith.constant 0.000000e+00 : f32
    %91 = vector.broadcast %cst_53 : f32 to vector<32x128xf32>
    %92 = arith.maximumf %90, %91 : vector<32x128xf32>
    %cst_54 = arith.constant dense<0.000000e+00> : vector<32x128xf32>
    %93 = tpu.matmul %83, %85, %cst_54 {dimension_numbers = #tpu.dot_dimension_numbers<[1], [0], [0], [1], [0, 0, 1, 1], [], []>} : vector<32x128xbf16>, vector<128x128xbf16>, vector<32x128xf32> -> vector<32x128xf32>
    %94 = vector.broadcast %87 : vector<1x128xf32> to vector<32x128xf32>
    %95 = arith.addf %93, %94 : vector<32x128xf32>
    %cst_55 = arith.constant 0.000000e+00 : f32
    %96 = vector.broadcast %cst_55 : f32 to vector<32x128xf32>
    %97 = arith.maximumf %95, %96 : vector<32x128xf32>
    %98 = arith.truncf %92 : vector<32x128xf32> to vector<32x128xbf16>
    %99 = arith.truncf %97 : vector<32x128xf32> to vector<32x128xbf16>
    %c6 = arith.constant 6 : index
    %c0_56 = arith.constant 0 : index
    %c0_57 = arith.constant 0 : index
    %100 = vector.load %arg2[%c6, %c0_56, %c0_57] : memref<8x256x256xbf16, #tpu.memory_space<vmem>>, vector<1x128x128xbf16>
    %101 = vector.shape_cast %100 : vector<1x128x128xbf16> to vector<128x128xbf16>
    %c6_58 = arith.constant 6 : index
    %c0_59 = arith.constant 0 : index
    %c0_60 = arith.constant 0 : index
    %102 = vector.load %arg3[%c6_58, %c0_59, %c0_60] : memref<8x1x256xf32, #tpu.memory_space<vmem>>, vector<1x1x128xf32>
    %103 = vector.shape_cast %102 : vector<1x1x128xf32> to vector<1x128xf32>
    %cst_61 = arith.constant dense<0.000000e+00> : vector<32x128xf32>
    %104 = tpu.matmul %98, %101, %cst_61 {dimension_numbers = #tpu.dot_dimension_numbers<[1], [0], [0], [1], [0, 0, 1, 1], [], []>} : vector<32x128xbf16>, vector<128x128xbf16>, vector<32x128xf32> -> vector<32x128xf32>
    %105 = vector.broadcast %103 : vector<1x128xf32> to vector<32x128xf32>
    %106 = arith.addf %104, %105 : vector<32x128xf32>
    %cst_62 = arith.constant 0.000000e+00 : f32
    %107 = vector.broadcast %cst_62 : f32 to vector<32x128xf32>
    %108 = arith.maximumf %106, %107 : vector<32x128xf32>
    %cst_63 = arith.constant dense<0.000000e+00> : vector<32x128xf32>
    %109 = tpu.matmul %99, %101, %cst_63 {dimension_numbers = #tpu.dot_dimension_numbers<[1], [0], [0], [1], [0, 0, 1, 1], [], []>} : vector<32x128xbf16>, vector<128x128xbf16>, vector<32x128xf32> -> vector<32x128xf32>
    %110 = vector.broadcast %103 : vector<1x128xf32> to vector<32x128xf32>
    %111 = arith.addf %109, %110 : vector<32x128xf32>
    %cst_64 = arith.constant 0.000000e+00 : f32
    %112 = vector.broadcast %cst_64 : f32 to vector<32x128xf32>
    %113 = arith.maximumf %111, %112 : vector<32x128xf32>
    %114 = arith.truncf %108 : vector<32x128xf32> to vector<32x128xbf16>
    %115 = arith.truncf %113 : vector<32x128xf32> to vector<32x128xbf16>
    %c7 = arith.constant 7 : index
    %c0_65 = arith.constant 0 : index
    %c0_66 = arith.constant 0 : index
    %116 = vector.load %arg2[%c7, %c0_65, %c0_66] : memref<8x256x256xbf16, #tpu.memory_space<vmem>>, vector<1x128x128xbf16>
    %117 = vector.shape_cast %116 : vector<1x128x128xbf16> to vector<128x128xbf16>
    %c7_67 = arith.constant 7 : index
    %c0_68 = arith.constant 0 : index
    %c0_69 = arith.constant 0 : index
    %118 = vector.load %arg3[%c7_67, %c0_68, %c0_69] : memref<8x1x256xf32, #tpu.memory_space<vmem>>, vector<1x1x128xf32>
    %119 = vector.shape_cast %118 : vector<1x1x128xf32> to vector<1x128xf32>
    %cst_70 = arith.constant dense<0.000000e+00> : vector<32x128xf32>
    %120 = tpu.matmul %114, %117, %cst_70 {dimension_numbers = #tpu.dot_dimension_numbers<[1], [0], [0], [1], [0, 0, 1, 1], [], []>} : vector<32x128xbf16>, vector<128x128xbf16>, vector<32x128xf32> -> vector<32x128xf32>
    %121 = vector.broadcast %119 : vector<1x128xf32> to vector<32x128xf32>
    %122 = arith.addf %120, %121 : vector<32x128xf32>
    %cst_71 = arith.constant 0.000000e+00 : f32
    %123 = vector.broadcast %cst_71 : f32 to vector<32x128xf32>
    %124 = arith.maximumf %122, %123 : vector<32x128xf32>
    %cst_72 = arith.constant dense<0.000000e+00> : vector<32x128xf32>
    %125 = tpu.matmul %115, %117, %cst_72 {dimension_numbers = #tpu.dot_dimension_numbers<[1], [0], [0], [1], [0, 0, 1, 1], [], []>} : vector<32x128xbf16>, vector<128x128xbf16>, vector<32x128xf32> -> vector<32x128xf32>
    %126 = vector.broadcast %119 : vector<1x128xf32> to vector<32x128xf32>
    %127 = arith.addf %125, %126 : vector<32x128xf32>
    %cst_73 = arith.constant 0.000000e+00 : f32
    %128 = vector.broadcast %cst_73 : f32 to vector<32x128xf32>
    %129 = arith.maximumf %127, %128 : vector<32x128xf32>
    %c0_74 = arith.constant 0 : index
    %c0_75 = arith.constant 0 : index
    %130 = vector.load %arg4[%c0_74, %c0_75] : memref<64x128xf32, #tpu.memory_space<vmem>>, vector<32x128xf32>
    tpu.vector_store %arg4[%c0_74, %c0_75], %124 {strides = array<i32>} : memref<64x128xf32, #tpu.memory_space<vmem>>, vector<32x128xf32>,
    %c32_76 = arith.constant 32 : index
    %c0_77 = arith.constant 0 : index
    %131 = vector.load %arg4[%c32_76, %c0_77] : memref<64x128xf32, #tpu.memory_space<vmem>>, vector<32x128xf32>
    tpu.vector_store %arg4[%c32_76, %c0_77], %129 {strides = array<i32>} : memref<64x128xf32, #tpu.memory_space<vmem>>, vector<32x128xf32>,
    return
  }
  func.func @transform_0(%arg0: i32) -> (i32, i32) {
    %c0_i32 = arith.constant 0 : i32
    %c0_i32_0 = arith.constant 0 : i32
    return %arg0, %c0_i32 : i32, i32
  }
  func.func @transform_1(%arg0: i32) -> (i32, i32, i32) {
    %c0_i32 = arith.constant 0 : i32
    %c0_i32_0 = arith.constant 0 : i32
    %c0_i32_1 = arith.constant 0 : i32
    %c0_i32_2 = arith.constant 0 : i32
    return %c0_i32, %c0_i32_0, %c0_i32_1 : i32, i32, i32
  }
  func.func @transform_2(%arg0: i32) -> (i32, i32, i32) {
    %c0_i32 = arith.constant 0 : i32
    %c0_i32_0 = arith.constant 0 : i32
    %c0_i32_1 = arith.constant 0 : i32
    %c0_i32_2 = arith.constant 0 : i32
    return %c0_i32, %c0_i32_0, %c0_i32_1 : i32, i32, i32
  }
  func.func @transform_3(%arg0: i32) -> (i32, i32) {
    %c0_i32 = arith.constant 0 : i32
    %c0_i32_0 = arith.constant 0 : i32
    return %arg0, %c0_i32 : i32, i32
  }
}

</mosaic_0001>

<llo_original>
// kernel: _mlp_forward_impl.1
$region0: #{_mlp_forward_impl.1}
  #allocation0 [shape = 'u32[]', space=smem, size = 0x4, offset = 0x4, fixed_abs, tag = 'smem constant byte address 0x4 - core index']
  #allocation1 [shape = 'u32[144,128]{1,0:T(1,128)}', space=vmem, size = 0x12000, scoped, tag = 'internal scratch']
  %s0 = inlined_call_operand.vmem [shape: f32[64,16], index: 0, kind: input, shape index: {}]
  %s1 = inlined_call_operand.hbm [shape: bf16[8,256,256], index: 1, kind: input, shape index: {}]
  %s2 = inlined_call_operand.vmem [shape: f32[8,1,256], index: 2, kind: input, shape index: {}]
  %s3 = inlined_call_operand.vmem [shape: f32[64,128], index: 3, kind: output, shape index: {}]
  %s4 = sld [smem:[#allocation0]]
  $region26: #{_mlp_forward_impl.1} parent=0
    _
  %s6 = ssub.s32 1, %s4
  %s7 = scalar_select 0, %s6, %s4
  $region1: #{_mlp_forward_impl.1} parent=0
    #allocation2 [shape = 'u8[1048576]{0}', space=vmem, size = 0x100000, scoped, tag = 'input window, operand 1, single buffered']
    #allocation3 [shape = 's32[1]{0}', space=sflag, size = 0x4, scoped, tag = 'scoped memory for _mlp_forward_impl.1']
    %8 = vsyncpa [#allocation3], 0
    // Predicated region
    $region2: #{_mlp_forward_impl.1} parent=1 // pred_check
      _
    $region3: #{_mlp_forward_impl.1} parent=1 // pred_check_branch
      %10 = sbr.rel (0) target = $region5
    $region4: #{_mlp_forward_impl.1} parent=1 // pred_region
      _
    $region5: #{_mlp_forward_impl.1} parent=1 // pred_fallthru
      _
    // Predicated region
    $region6: #{_mlp_forward_impl.1} parent=1 // pred_check
      _
    $region7: #{_mlp_forward_impl.1} parent=1 // pred_check_branch
      %12 = sbr.rel (0) target = $region9
    $region8: #{_mlp_forward_impl.1} parent=1 // pred_region
      %s14 = ssub.s32 32768, 32768
      %15 = vsyncadd [#allocation3], %s14
      %s16 = sshll.u32 [#allocation2], 4
      %s17 = int_to_ptr.vmem [resolvable:$true] %s16
      %22 = dma.hbm_to_vmem [thread:$0]  %s1, 32768, %s17, [#allocation3], 128, 128, 8
    $region9: #{_mlp_forward_impl.1} parent=1 // pred_fallthru
      _
    // Predicated region
    $region10: #{_mlp_forward_impl.1} parent=1 // pred_check
      _
    $region11: #{_mlp_forward_impl.1} parent=1 // pred_check_branch
      %24 = sbr.rel (0) target = $region13
    $region12: #{_mlp_forward_impl.1} parent=1 // pred_region
      _
    $region13: #{_mlp_forward_impl.1} parent=1 // pred_fallthru
      _
    // Predicated region
    $region14: #{_mlp_forward_impl.1} parent=1 // pred_check
      _
    $region15: #{_mlp_forward_impl.1} parent=1 // pred_check_branch
      %26 = sbr.rel (0) target = $region17
    $region16: #{_mlp_forward_impl.1} parent=1 // pred_region
      %27 = dma.done [#allocation3], 32768
    $region17: #{_mlp_forward_impl.1} parent=1 // pred_fallthru
      _
    %v29 = vld [vmem:[%s0] sm:$0xff]
    %v30 = vld [vmem:[%s0 + $0x8] sm:$0xff]
    %v31 = vld [vmem:[%s0 + $0x10] sm:$0xff]
    %v32 = vld [vmem:[%s0 + $0x18] sm:$0xff]
    %v33 = vpack.c.bf16 %v30, %v29
    %v34 = vpack.c.bf16 %v32, %v31
    %v35 = vld [vmem:[%s0 + $0x20] sm:$0xff]
    %v36 = vld [vmem:[%s0 + $0x28] sm:$0xff]
    %v37 = vld [vmem:[%s0 + $0x30] sm:$0xff]
    %v38 = vld [vmem:[%s0 + $0x38] sm:$0xff]
    %v39 = vpack.c.bf16 %v36, %v35
    %v40 = vpack.c.bf16 %v38, %v37
    %v41 = vld [vmem:[#allocation2] sm:$0xf]
    %v42 = vld [vmem:[#allocation2 + $0x8] sm:$0xf]
    %v43 = vld [vmem:[%s2] sm:$0x1]
    %v45 = vlaneseq
    %v46 = vshrl.u32 %v45, 7
    %v47 = vsub.s32 0, %v46
    %v48 = vrot.slane %v43, %v47
    %v52 = vunpack.c.l.b16 %v41
    %v53 = vunpack.c.l.b16 %v42
    %v54 = vpack.c.b16 %v53, %v52
    %vm56 = vcmask 130048
    %v58 = vsel %vm56, %v33, 0
    %v61 = vsel %vm56, %v34, 0
    %63 = vmatprep.subr.bf16.mxu0 0
    %64 = vmatpush1.bf16.msra.mxu0 %v54
    %65 = vmatprep.subr.bf16.mxu0 0
    %66 = vmatpush1.bf16.msra.mxu0 0
    %67 = vmatprep.subr.bf16.mxu0 0
    %68 = vmatpush1.bf16.msra.mxu0 0
    %69 = vmatprep.subr.bf16.mxu0 0
    %70 = vmatpush1.bf16.msra.mxu0 0
    %71 = vmatprep.subr.bf16.mxu0 0
    %72 = vmatpush1.bf16.msra.mxu0 0
    %73 = vmatprep.subr.bf16.mxu0 0
    %74 = vmatpush1.bf16.msra.mxu0 0
    %75 = vmatprep.subr.bf16.mxu0 0
    %76 = vmatpush1.bf16.msra.mxu0 0
    %77 = vmatprep.subr.bf16.mxu0 0
    %78 = vmatpush1.bf16.msra.mxu0 0
    %79 = vmatprep.subr.bf16.mxu0 0
    %80 = vmatpush1.bf16.msra.mxu0 0
    %81 = vmatprep.subr.bf16.mxu0 0
    %82 = vmatpush1.bf16.msra.mxu0 0
    %83 = vmatprep.subr.bf16.mxu0 0
    %84 = vmatpush1.bf16.msra.mxu0 0
    %85 = vmatprep.subr.bf16.mxu0 0
    %86 = vmatpush1.bf16.msra.mxu0 0
    %87 = vmatprep.subr.bf16.mxu0 0
    %88 = vmatpush1.bf16.msra.mxu0 0
    %89 = vmatprep.subr.bf16.mxu0 0
    %90 = vmatpush1.bf16.msra.mxu0 0
    %91 = vmatprep.subr.bf16.mxu0 0
    %92 = vmatpush1.bf16.msra.mxu0 0
    %93 = vmatprep.subr.bf16.mxu0 0
    %94 = vmatpush1.bf16.msra.mxu0 0
    %95 = vmatprep.mubr.bf16.mxu0 0
    %96 = vmatmul.mubr.bf16.gmra.mrb[0].mxu0 %v58
    %v97 = vpop.f32.mrb[0].mxu0
    %v98 = vadd.f32 %v48, %v97
    %v99 = vpop.f32.mrb[0].mxu0
    %v100 = vpop.f32.mrb[0].mxu0
    %v101 = vadd.f32 %v48, %v100
    %v102 = vpop.f32.mrb[0].mxu0
    %103 = vmatprep.mubr.bf16.mxu0 0
    %104 = vmatmul.mubr.bf16.gmra.mrb[0].mxu0 %v61
    %v105 = vpop.f32.mrb[0].mxu0
    %v106 = vadd.f32 %v48, %v105
    %v107 = vpop.f32.mrb[0].mxu0
    %v108 = vpop.f32.mrb[0].mxu0
    %v109 = vadd.f32 %v48, %v108
    %v110 = vpop.f32.mrb[0].mxu0
    %111 = vdwg.mxu0
    %v112 = vmax.f32 %v98, 0.0
    %v113 = vmax.f32 %v101, 0.0
    %v114 = vmax.f32 %v106, 0.0
    %v115 = vmax.f32 %v109, 0.0
    %v117 = vsel %vm56, %v39, 0
    %v120 = vsel %vm56, %v40, 0
    %122 = vmatprep.subr.bf16.mxu0 0
    %123 = vmatpush1.bf16.msra.mxu0 %v54
    %124 = vmatprep.subr.bf16.mxu0 0
    %125 = vmatpush1.bf16.msra.mxu0 0
    %126 = vmatprep.subr.bf16.mxu0 0
    %127 = vmatpush1.bf16.msra.mxu0 0
    %128 = vmatprep.subr.bf16.mxu0 0
    %129 = vmatpush1.bf16.msra.mxu0 0
    %130 = vmatprep.subr.bf16.mxu0 0
    %131 = vmatpush1.bf16.msra.mxu0 0
    %132 = vmatprep.subr.bf16.mxu0 0
    %133 = vmatpush1.bf16.msra.mxu0 0
    %134 = vmatprep.subr.bf16.mxu0 0
    %135 = vmatpush1.bf16.msra.mxu0 0
    %136 = vmatprep.subr.bf16.mxu0 0
    %137 = vmatpush1.bf16.msra.mxu0 0
    %138 = vmatprep.subr.bf16.mxu0 0
    %139 = vmatpush1.bf16.msra.mxu0 0
    %140 = vmatprep.subr.bf16.mxu0 0
    %141 = vmatpush1.bf16.msra.mxu0 0
    %142 = vmatprep.subr.bf16.mxu0 0
    %143 = vmatpush1.bf16.msra.mxu0 0
    %144 = vmatprep.subr.bf16.mxu0 0
    %145 = vmatpush1.bf16.msra.mxu0 0
    %146 = vmatprep.subr.bf16.mxu0 0
    %147 = vmatpush1.bf16.msra.mxu0 0
    %148 = vmatprep.subr.bf16.mxu0 0
    %149 = vmatpush1.bf16.msra.mxu0 0
    %150 = vmatprep.subr.bf16.mxu0 0
    %151 = vmatpush1.bf16.msra.mxu0 0
    %152 = vmatprep.subr.bf16.mxu0 0
    %153 = vmatpush1.bf16.msra.mxu0 0
    %154 = vmatprep.mubr.bf16.mxu0 0
    %155 = vmatmul.mubr.bf16.gmra.mrb[0].mxu0 %v117
    %v156 = vpop.f32.mrb[0].mxu0
    %v157 = vadd.f32 %v48, %v156
    %v158 = vpop.f32.mrb[0].mxu0
    %v159 = vpop.f32.mrb[0].mxu0
    %v160 = vadd.f32 %v48, %v159
    %v161 = vpop.f32.mrb[0].mxu0
    %162 = vmatprep.mubr.bf16.mxu0 0
    %163 = vmatmul.mubr.bf16.gmra.mrb[0].mxu0 %v120
    %v164 = vpop.f32.mrb[0].mxu0
    %v165 = vadd.f32 %v48, %v164
    %v166 = vpop.f32.mrb[0].mxu0
    %v167 = vpop.f32.mrb[0].mxu0
    %v168 = vadd.f32 %v48, %v167
    %v169 = vpop.f32.mrb[0].mxu0
    %170 = vdwg.mxu0
    %v171 = vmax.f32 %v157, 0.0
    %v172 = vmax.f32 %v160, 0.0
    %v173 = vmax.f32 %v165, 0.0
    %v174 = vmax.f32 %v168, 0.0
    %v175 = vpack.c.bf16 %v113, %v112
    %v176 = vpack.c.bf16 %v115, %v114
    %v177 = vpack.c.bf16 %v172, %v171
    %v178 = vpack.c.bf16 %v174, %v173
    %s179 = scalar_lea.vmem [#allocation2], 256
    %v180 = vld [vmem:[%s179] sm:$0xf]
    %v181 = vld [vmem:[%s179 + $0x8] sm:$0xf]
    %v182 = vld [vmem:[%s179 + $0x10] sm:$0xf]
    %v183 = vld [vmem:[%s179 + $0x18] sm:$0xf]
    %v184 = vld [vmem:[%s179 + $0x20] sm:$0xf]
    %v185 = vld [vmem:[%s179 + $0x28] sm:$0xf]
    %v186 = vld [vmem:[%s179 + $0x30] sm:$0xf]
    %v187 = vld [vmem:[%s179 + $0x38] sm:$0xf]
    %v188 = vld [vmem:[%s179 + $0x40] sm:$0xf]
    %v189 = vld [vmem:[%s179 + $0x48] sm:$0xf]
    %v190 = vld [vmem:[%s179 + $0x50] sm:$0xf]
    %v191 = vld [vmem:[%s179 + $0x58] sm:$0xf]
    %v192 = vld [vmem:[%s179 + $0x60] sm:$0xf]
    %v193 = vld [vmem:[%s179 + $0x68] sm:$0xf]
    %v194 = vld [vmem:[%s179 + $0x70] sm:$0xf]
    %v195 = vld [vmem:[%s179 + $0x78] sm:$0xf]
    %s196 = scalar_lea.vmem %s2, 2
    %v197 = vld [vmem:[%s196] sm:$0x1]
    %v199 = vlaneseq
    %v200 = vshrl.u32 %v199, 7
    %v201 = vsub.s32 0, %v200
    %v202 = vrot.slane %v197, %v201
    %v220 = vunpack.c.l.b16 %v180
    %v221 = vunpack.c.l.b16 %v181
    %v222 = vunpack.c.l.b16 %v182
    %v223 = vunpack.c.l.b16 %v183
    %v224 = vunpack.c.l.b16 %v184
    %v225 = vunpack.c.l.b16 %v185
    %v226 = vunpack.c.l.b16 %v186
    %v227 = vunpack.c.l.b16 %v187
    %v228 = vunpack.c.l.b16 %v188
    %v229 = vunpack.c.l.b16 %v189
    %v230 = vunpack.c.l.b16 %v190
    %v231 = vunpack.c.l.b16 %v191
    %v232 = vunpack.c.l.b16 %v192
    %v233 = vunpack.c.l.b16 %v193
    %v234 = vunpack.c.l.b16 %v194
    %v235 = vunpack.c.l.b16 %v195
    %v236 = vpack.c.b16 %v221, %v220
    %v237 = vpack.c.b16 %v223, %v222
    %v238 = vpack.c.b16 %v225, %v224
    %v239 = vpack.c.b16 %v227, %v226
    %v240 = vpack.c.b16 %v229, %v228
    %v241 = vpack.c.b16 %v231, %v230
    %v242 = vpack.c.b16 %v233, %v232
    %v243 = vpack.c.b16 %v235, %v234
    %252 = vmatprep.subr.bf16.mxu0 0
    %253 = vmatpush1.bf16.msra.mxu0 %v236
    %254 = vmatprep.subr.bf16.mxu0 0
    %255 = vmatpush1.bf16.msra.mxu0 %v237
    %256 = vmatprep.subr.bf16.mxu0 0
    %257 = vmatpush1.bf16.msra.mxu0 %v238
    %258 = vmatprep.subr.bf16.mxu0 0
    %259 = vmatpush1.bf16.msra.mxu0 %v239
    %260 = vmatprep.subr.bf16.mxu0 0
    %261 = vmatpush1.bf16.msra.mxu0 %v240
    %262 = vmatprep.subr.bf16.mxu0 0
    %263 = vmatpush1.bf16.msra.mxu0 %v241
    %264 = vmatprep.subr.bf16.mxu0 0
    %265 = vmatpush1.bf16.msra.mxu0 %v242
    %266 = vmatprep.subr.bf16.mxu0 0
    %267 = vmatpush1.bf16.msra.mxu0 %v243
    %268 = vmatprep.subr.bf16.mxu0 0
    %269 = vmatpush1.bf16.msra.mxu0 0
    %270 = vmatprep.subr.bf16.mxu0 0
    %271 = vmatpush1.bf16.msra.mxu0 0
    %272 = vmatprep.subr.bf16.mxu0 0
    %273 = vmatpush1.bf16.msra.mxu0 0
    %274 = vmatprep.subr.bf16.mxu0 0
    %275 = vmatpush1.bf16.msra.mxu0 0
    %276 = vmatprep.subr.bf16.mxu0 0
    %277 = vmatpush1.bf16.msra.mxu0 0
    %278 = vmatprep.subr.bf16.mxu0 0
    %279 = vmatpush1.bf16.msra.mxu0 0
    %280 = vmatprep.subr.bf16.mxu0 0
    %281 = vmatpush1.bf16.msra.mxu0 0
    %282 = vmatprep.subr.bf16.mxu0 0
    %283 = vmatpush1.bf16.msra.mxu0 0
    %284 = vmatprep.mubr.bf16.mxu0 0
    %285 = vmatmul.mubr.bf16.gmra.mrb[0].mxu0 %v175
    %v286 = vpop.f32.mrb[0].mxu0
    %v287 = vadd.f32 %v202, %v286
    %v288 = vpop.f32.mrb[0].mxu0
    %v289 = vpop.f32.mrb[0].mxu0
    %v290 = vadd.f32 %v202, %v289
    %v291 = vpop.f32.mrb[0].mxu0
    %292 = vmatprep.mubr.bf16.mxu0 0
    %293 = vmatmul.mubr.bf16.gmra.mrb[0].mxu0 %v176
    %v294 = vpop.f32.mrb[0].mxu0
    %v295 = vadd.f32 %v202, %v294
    %v296 = vpop.f32.mrb[0].mxu0
    %v297 = vpop.f32.mrb[0].mxu0
    %v298 = vadd.f32 %v202, %v297
    %v299 = vpop.f32.mrb[0].mxu0
    %300 = vdwg.mxu0
    %v301 = vmax.f32 %v287, 0.0
    %v302 = vmax.f32 %v290, 0.0
    %v303 = vmax.f32 %v295, 0.0
    %v304 = vmax.f32 %v298, 0.0
    %305 = vmatprep.subr.bf16.mxu0 0
    %306 = vmatpush1.bf16.msra.mxu0 %v236
    %307 = vmatprep.subr.bf16.mxu0 0
    %308 = vmatpush1.bf16.msra.mxu0 %v237
    %309 = vmatprep.subr.bf16.mxu0 0
    %310 = vmatpush1.bf16.msra.mxu0 %v238
    %311 = vmatprep.subr.bf16.mxu0 0
    %312 = vmatpush1.bf16.msra.mxu0 %v239
    %313 = vmatprep.subr.bf16.mxu0 0
    %314 = vmatpush1.bf16.msra.mxu0 %v240
    %315 = vmatprep.subr.bf16.mxu0 0
    %316 = vmatpush1.bf16.msra.mxu0 %v241
    %317 = vmatprep.subr.bf16.mxu0 0
    %318 = vmatpush1.bf16.msra.mxu0 %v242
    %319 = vmatprep.subr.bf16.mxu0 0
    %320 = vmatpush1.bf16.msra.mxu0 %v243
    %321 = vmatprep.subr.bf16.mxu0 0
    %322 = vmatpush1.bf16.msra.mxu0 0
    %323 = vmatprep.subr.bf16.mxu0 0
    %324 = vmatpush1.bf16.msra.mxu0 0
    %325 = vmatprep.subr.bf16.mxu0 0
    %326 = vmatpush1.bf16.msra.mxu0 0
    %327 = vmatprep.subr.bf16.mxu0 0
    %328 = vmatpush1.bf16.msra.mxu0 0
    %329 = vmatprep.subr.bf16.mxu0 0
    %330 = vmatpush1.bf16.msra.mxu0 0
    %331 = vmatprep.subr.bf16.mxu0 0
    %332 = vmatpush1.bf16.msra.mxu0 0
    %333 = vmatprep.subr.bf16.mxu0 0
    %334 = vmatpush1.bf16.msra.mxu0 0
    %335 = vmatprep.subr.bf16.mxu0 0
    %336 = vmatpush1.bf16.msra.mxu0 0
    %337 = vmatprep.mubr.bf16.mxu0 0
    %338 = vmatmul.mubr.bf16.gmra.mrb[0].mxu0 %v177
    %v339 = vpop.f32.mrb[0].mxu0
    %v340 = vadd.f32 %v202, %v339
    %v341 = vpop.f32.mrb[0].mxu0
    %v342 = vpop.f32.mrb[0].mxu0
    %v343 = vadd.f32 %v202, %v342
    %v344 = vpop.f32.mrb[0].mxu0
    %345 = vmatprep.mubr.bf16.mxu0 0
    %346 = vmatmul.mubr.bf16.gmra.mrb[0].mxu0 %v178
    %v347 = vpop.f32.mrb[0].mxu0
    %v348 = vadd.f32 %v202, %v347
    %v349 = vpop.f32.mrb[0].mxu0
    %v350 = vpop.f32.mrb[0].mxu0
    %v351 = vadd.f32 %v202, %v350
    %v352 = vpop.f32.mrb[0].mxu0
    %353 = vdwg.mxu0
    %v354 = vmax.f32 %v340, 0.0
    %v355 = vmax.f32 %v343, 0.0
    %v356 = vmax.f32 %v348, 0.0
    %v357 = vmax.f32 %v351, 0.0
    %v358 = vpack.c.bf16 %v302, %v301
    %v359 = vpack.c.bf16 %v304, %v303
    %v360 = vpack.c.bf16 %v355, %v354
    %v361 = vpack.c.bf16 %v357, %v356
    %s362 = scalar_lea.vmem [#allocation2], 512
    %v363 = vld [vmem:[%s362] sm:$0xf]
    %v364 = vld [vmem:[%s362 + $0x8] sm:$0xf]
    %v365 = vld [vmem:[%s362 + $0x10] sm:$0xf]
    %v366 = vld [vmem:[%s362 + $0x18] sm:$0xf]
    %v367 = vld [vmem:[%s362 + $0x20] sm:$0xf]
    %v368 = vld [vmem:[%s362 + $0x28] sm:$0xf]
    %v369 = vld [vmem:[%s362 + $0x30] sm:$0xf]
    %v370 = vld [vmem:[%s362 + $0x38] sm:$0xf]
    %v371 = vld [vmem:[%s362 + $0x40] sm:$0xf]
    %v372 = vld [vmem:[%s362 + $0x48] sm:$0xf]
    %v373 = vld [vmem:[%s362 + $0x50] sm:$0xf]
    %v374 = vld [vmem:[%s362 + $0x58] sm:$0xf]
    %v375 = vld [vmem:[%s362 + $0x60] sm:$0xf]
    %v376 = vld [vmem:[%s362 + $0x68] sm:$0xf]
    %v377 = vld [vmem:[%s362 + $0x70] sm:$0xf]
    %v378 = vld [vmem:[%s362 + $0x78] sm:$0xf]
    %s379 = scalar_lea.vmem %s2, 4
    %v380 = vld [vmem:[%s379] sm:$0x1]
    %v382 = vlaneseq
    %v383 = vshrl.u32 %v382, 7
    %v384 = vsub.s32 0, %v383
    %v385 = vrot.slane %v380, %v384
    %v403 = vunpack.c.l.b16 %v363
    %v404 = vunpack.c.l.b16 %v364
    %v405 = vunpack.c.l.b16 %v365
    %v406 = vunpack.c.l.b16 %v366
    %v407 = vunpack.c.l.b16 %v367
    %v408 = vunpack.c.l.b16 %v368
    %v409 = vunpack.c.l.b16 %v369
    %v410 = vunpack.c.l.b16 %v370
    %v411 = vunpack.c.l.b16 %v371
    %v412 = vunpack.c.l.b16 %v372
    %v413 = vunpack.c.l.b16 %v373
    %v414 = vunpack.c.l.b16 %v374
    %v415 = vunpack.c.l.b16 %v375
    %v416 = vunpack.c.l.b16 %v376
    %v417 = vunpack.c.l.b16 %v377
    %v418 = vunpack.c.l.b16 %v378
    %v419 = vpack.c.b16 %v404, %v403
    %v420 = vpack.c.b16 %v406, %v405
    %v421 = vpack.c.b16 %v408, %v407
    %v422 = vpack.c.b16 %v410, %v409
    %v423 = vpack.c.b16 %v412, %v411
    %v424 = vpack.c.b16 %v414, %v413
    %v425 = vpack.c.b16 %v416, %v415
    %v426 = vpack.c.b16 %v418, %v417
    %435 = vmatprep.subr.bf16.mxu0 0
    %436 = vmatpush1.bf16.msra.mxu0 %v419
    %437 = vmatprep.subr.bf16.mxu0 0
    %438 = vmatpush1.bf16.msra.mxu0 %v420
    %439 = vmatprep.subr.bf16.mxu0 0
    %440 = vmatpush1.bf16.msra.mxu0 %v421
    %441 = vmatprep.subr.bf16.mxu0 0
    %442 = vmatpush1.bf16.msra.mxu0 %v422
    %443 = vmatprep.subr.bf16.mxu0 0
    %444 = vmatpush1.bf16.msra.mxu0 %v423
    %445 = vmatprep.subr.bf16.mxu0 0
    %446 = vmatpush1.bf16.msra.mxu0 %v424
    %447 = vmatprep.subr.bf16.mxu0 0
    %448 = vmatpush1.bf16.msra.mxu0 %v425
    %449 = vmatprep.subr.bf16.mxu0 0
    %450 = vmatpush1.bf16.msra.mxu0 %v426
    %451 = vmatprep.subr.bf16.mxu0 0
    %452 = vmatpush1.bf16.msra.mxu0 0
    %453 = vmatprep.subr.bf16.mxu0 0
    %454 = vmatpush1.bf16.msra.mxu0 0
    %455 = vmatprep.subr.bf16.mxu0 0
    %456 = vmatpush1.bf16.msra.mxu0 0
    %457 = vmatprep.subr.bf16.mxu0 0
    %458 = vmatpush1.bf16.msra.mxu0 0
    %459 = vmatprep.subr.bf16.mxu0 0
    %460 = vmatpush1.bf16.msra.mxu0 0
    %461 = vmatprep.subr.bf16.mxu0 0
    %462 = vmatpush1.bf16.msra.mxu0 0
    %463 = vmatprep.subr.bf16.mxu0 0
    %464 = vmatpush1.bf16.msra.mxu0 0
    %465 = vmatprep.subr.bf16.mxu0 0
    %466 = vmatpush1.bf16.msra.mxu0 0
    %467 = vmatprep.mubr.bf16.mxu0 0
    %468 = vmatmul.mubr.bf16.gmra.mrb[0].mxu0 %v358
    %v469 = vpop.f32.mrb[0].mxu0
    %v470 = vadd.f32 %v385, %v469
    %v471 = vpop.f32.mrb[0].mxu0
    %v472 = vpop.f32.mrb[0].mxu0
    %v473 = vadd.f32 %v385, %v472
    %v474 = vpop.f32.mrb[0].mxu0
    %475 = vmatprep.mubr.bf16.mxu0 0
    %476 = vmatmul.mubr.bf16.gmra.mrb[0].mxu0 %v359
    %v477 = vpop.f32.mrb[0].mxu0
    %v478 = vadd.f32 %v385, %v477
    %v479 = vpop.f32.mrb[0].mxu0
    %v480 = vpop.f32.mrb[0].mxu0
    %v481 = vadd.f32 %v385, %v480
    %v482 = vpop.f32.mrb[0].mxu0
    %483 = vdwg.mxu0
    %v484 = vmax.f32 %v470, 0.0
    %v485 = vmax.f32 %v473, 0.0
    %v486 = vmax.f32 %v478, 0.0
    %v487 = vmax.f32 %v481, 0.0
    %488 = vmatprep.subr.bf16.mxu0 0
    %489 = vmatpush1.bf16.msra.mxu0 %v419
    %490 = vmatprep.subr.bf16.mxu0 0
    %491 = vmatpush1.bf16.msra.mxu0 %v420
    %492 = vmatprep.subr.bf16.mxu0 0
    %493 = vmatpush1.bf16.msra.mxu0 %v421
    %494 = vmatprep.subr.bf16.mxu0 0
    %495 = vmatpush1.bf16.msra.mxu0 %v422
    %496 = vmatprep.subr.bf16.mxu0 0
    %497 = vmatpush1.bf16.msra.mxu0 %v423
    %498 = vmatprep.subr.bf16.mxu0 0
    %499 = vmatpush1.bf16.msra.mxu0 %v424
    %500 = vmatprep.subr.bf16.mxu0 0
    %501 = vmatpush1.bf16.msra.mxu0 %v425
    %502 = vmatprep.subr.bf16.mxu0 0
    %503 = vmatpush1.bf16.msra.mxu0 %v426
    %504 = vmatprep.subr.bf16.mxu0 0
    %505 = vmatpush1.bf16.msra.mxu0 0
    %506 = vmatprep.subr.bf16.mxu0 0
    %507 = vmatpush1.bf16.msra.mxu0 0
    %508 = vmatprep.subr.bf16.mxu0 0
    %509 = vmatpush1.bf16.msra.mxu0 0
    %510 = vmatprep.subr.bf16.mxu0 0
    %511 = vmatpush1.bf16.msra.mxu0 0
    %512 = vmatprep.subr.bf16.mxu0 0
    %513 = vmatpush1.bf16.msra.mxu0 0
    %514 = vmatprep.subr.bf16.mxu0 0
    %515 = vmatpush1.bf16.msra.mxu0 0
    %516 = vmatprep.subr.bf16.mxu0 0
    %517 = vmatpush1.bf16.msra.mxu0 0
    %518 = vmatprep.subr.bf16.mxu0 0
    %519 = vmatpush1.bf16.msra.mxu0 0
    %520 = vmatprep.mubr.bf16.mxu0 0
    %521 = vmatmul.mubr.bf16.gmra.mrb[0].mxu0 %v360
    %v522 = vpop.f32.mrb[0].mxu0
    %v523 = vadd.f32 %v385, %v522
    %v524 = vpop.f32.mrb[0].mxu0
    %v525 = vpop.f32.mrb[0].mxu0
    %v526 = vadd.f32 %v385, %v525
    %v527 = vpop.f32.mrb[0].mxu0
    %528 = vmatprep.mubr.bf16.mxu0 0
    %529 = vmatmul.mubr.bf16.gmra.mrb[0].mxu0 %v361
    %v530 = vpop.f32.mrb[0].mxu0
    %v531 = vadd.f32 %v385, %v530
    %v532 = vpop.f32.mrb[0].mxu0
    %v533 = vpop.f32.mrb[0].mxu0
    %v534 = vadd.f32 %v385, %v533
    %v535 = vpop.f32.mrb[0].mxu0
    %536 = vdwg.mxu0
    %v537 = vmax.f32 %v523, 0.0
    %v538 = vmax.f32 %v526, 0.0
    %v539 = vmax.f32 %v531, 0.0
    %v540 = vmax.f32 %v534, 0.0
    %v541 = vpack.c.bf16 %v485, %v484
    %v542 = vpack.c.bf16 %v487, %v486
    %v543 = vpack.c.bf16 %v538, %v537
    %v544 = vpack.c.bf16 %v540, %v539
    %s545 = scalar_lea.vmem [#allocation2], 768
    %v546 = vld [vmem:[%s545] sm:$0xff]
    %v547 = vld [vmem:[%s545 + $0x8] sm:$0xff]
    %v548 = vld [vmem:[%s545 + $0x10] sm:$0xff]
    %v549 = vld [vmem:[%s545 + $0x18] sm:$0xff]
    %v550 = vld [vmem:[%s545 + $0x20] sm:$0xff]
    %v551 = vld [vmem:[%s545 + $0x28] sm:$0xff]
    %v552 = vld [vmem:[%s545 + $0x30] sm:$0xff]
    %v553 = vld [vmem:[%s545 + $0x38] sm:$0xff]
    %v554 = vld [vmem:[%s545 + $0x40] sm:$0xff]
    %v555 = vld [vmem:[%s545 + $0x48] sm:$0xff]
    %v556 = vld [vmem:[%s545 + $0x50] sm:$0xff]
    %v557 = vld [vmem:[%s545 + $0x58] sm:$0xff]
    %v558 = vld [vmem:[%s545 + $0x60] sm:$0xff]
    %v559 = vld [vmem:[%s545 + $0x68] sm:$0xff]
    %v560 = vld [vmem:[%s545 + $0x70] sm:$0xff]
    %v561 = vld [vmem:[%s545 + $0x78] sm:$0xff]
    %s562 = scalar_lea.vmem %s2, 6
    %v563 = vld [vmem:[%s562] sm:$0x3]
    %v565 = vlaneseq
    %v566 = vshrl.u32 %v565, 7
    %v567 = vsub.s32 0, %v566
    %v568 = vrot.slane %v563, %v567
    %v569 = vlaneseq
    %v570 = vshrl.u32 %v569, 7
    %v571 = vsub.s32 1, %v570
    %v572 = vrot.slane %v563, %v571
    %v591 = vunpack.c.l.b16 %v546
    %v592 = vunpack.c.h.b16 %v546
    %v593 = vunpack.c.l.b16 %v547
    %v594 = vunpack.c.h.b16 %v547
    %v595 = vunpack.c.l.b16 %v548
    %v596 = vunpack.c.h.b16 %v548
    %v597 = vunpack.c.l.b16 %v549
    %v598 = vunpack.c.h.b16 %v549
    %v599 = vunpack.c.l.b16 %v550
    %v600 = vunpack.c.h.b16 %v550
    %v601 = vunpack.c.l.b16 %v551
    %v602 = vunpack.c.h.b16 %v551
    %v603 = vunpack.c.l.b16 %v552
    %v604 = vunpack.c.h.b16 %v552
    %v605 = vunpack.c.l.b16 %v553
    %v606 = vunpack.c.h.b16 %v553
    %v607 = vunpack.c.l.b16 %v554
    %v608 = vunpack.c.h.b16 %v554
    %v609 = vunpack.c.l.b16 %v555
    %v610 = vunpack.c.h.b16 %v555
    %v611 = vunpack.c.l.b16 %v556
    %v612 = vunpack.c.h.b16 %v556
    %v613 = vunpack.c.l.b16 %v557
    %v614 = vunpack.c.h.b16 %v557
    %v615 = vunpack.c.l.b16 %v558
    %v616 = vunpack.c.h.b16 %v558
    %v617 = vunpack.c.l.b16 %v559
    %v618 = vunpack.c.h.b16 %v559
    %v619 = vunpack.c.l.b16 %v560
    %v620 = vunpack.c.h.b16 %v560
    %v621 = vunpack.c.l.b16 %v561
    %v622 = vunpack.c.h.b16 %v561
    %v623 = vpack.c.b16 %v593, %v591
    %v624 = vpack.c.b16 %v594, %v592
    %v625 = vpack.c.b16 %v597, %v595
    %v626 = vpack.c.b16 %v598, %v596
    %v627 = vpack.c.b16 %v601, %v599
    %v628 = vpack.c.b16 %v602, %v600
    %v629 = vpack.c.b16 %v605, %v603
    %v630 = vpack.c.b16 %v606, %v604
    %v631 = vpack.c.b16 %v609, %v607
    %v632 = vpack.c.b16 %v610, %v608
    %v633 = vpack.c.b16 %v613, %v611
    %v634 = vpack.c.b16 %v614, %v612
    %v635 = vpack.c.b16 %v617, %v615
    %v636 = vpack.c.b16 %v618, %v616
    %v637 = vpack.c.b16 %v621, %v619
    %v638 = vpack.c.b16 %v622, %v620
    %655 = vmatprep.subr.bf16.mxu0 %v624
    %656 = vmatpush1.bf16.msra.mxu0 %v623
    %657 = vmatprep.subr.bf16.mxu0 %v626
    %658 = vmatpush1.bf16.msra.mxu0 %v625
    %659 = vmatprep.subr.bf16.mxu0 %v628
    %660 = vmatpush1.bf16.msra.mxu0 %v627
    %661 = vmatprep.subr.bf16.mxu0 %v630
    %662 = vmatpush1.bf16.msra.mxu0 %v629
    %663 = vmatprep.subr.bf16.mxu0 %v632
    %664 = vmatpush1.bf16.msra.mxu0 %v631
    %665 = vmatprep.subr.bf16.mxu0 %v634
    %666 = vmatpush1.bf16.msra.mxu0 %v633
    %667 = vmatprep.subr.bf16.mxu0 %v636
    %668 = vmatpush1.bf16.msra.mxu0 %v635
    %669 = vmatprep.subr.bf16.mxu0 %v638
    %670 = vmatpush1.bf16.msra.mxu0 %v637
    %671 = vmatprep.subr.bf16.mxu0 0
    %672 = vmatpush1.bf16.msra.mxu0 0
    %673 = vmatprep.subr.bf16.mxu0 0
    %674 = vmatpush1.bf16.msra.mxu0 0
    %675 = vmatprep.subr.bf16.mxu0 0
    %676 = vmatpush1.bf16.msra.mxu0 0
    %677 = vmatprep.subr.bf16.mxu0 0
    %678 = vmatpush1.bf16.msra.mxu0 0
    %679 = vmatprep.subr.bf16.mxu0 0
    %680 = vmatpush1.bf16.msra.mxu0 0
    %681 = vmatprep.subr.bf16.mxu0 0
    %682 = vmatpush1.bf16.msra.mxu0 0
    %683 = vmatprep.subr.bf16.mxu0 0
    %684 = vmatpush1.bf16.msra.mxu0 0
    %685 = vmatprep.subr.bf16.mxu0 0
    %686 = vmatpush1.bf16.msra.mxu0 0
    %687 = vmatprep.mubr.bf16.mxu0 0
    %688 = vmatmul.mubr.bf16.gmra.mrb[0].mxu0 %v541
    %v689 = vpop.f32.mrb[0].mxu0
    %v690 = vadd.f32 %v568, %v689
    %v691 = vpop.f32.mrb[0].mxu0
    %v692 = vadd.f32 %v572, %v691
    %v693 = vpop.f32.mrb[0].mxu0
    %v694 = vadd.f32 %v568, %v693
    %v695 = vpop.f32.mrb[0].mxu0
    %v696 = vadd.f32 %v572, %v695
    %697 = vmatprep.mubr.bf16.mxu0 0
    %698 = vmatmul.mubr.bf16.gmra.mrb[0].mxu0 %v542
    %v699 = vpop.f32.mrb[0].mxu0
    %v700 = vadd.f32 %v568, %v699
    %v701 = vpop.f32.mrb[0].mxu0
    %v702 = vadd.f32 %v572, %v701
    %v703 = vpop.f32.mrb[0].mxu0
    %v704 = vadd.f32 %v568, %v703
    %v705 = vpop.f32.mrb[0].mxu0
    %v706 = vadd.f32 %v572, %v705
    %707 = vdwg.mxu0
    %v708 = vmax.f32 %v690, 0.0
    %v709 = vmax.f32 %v692, 0.0
    %v710 = vmax.f32 %v694, 0.0
    %v711 = vmax.f32 %v696, 0.0
    %v712 = vmax.f32 %v700, 0.0
    %v713 = vmax.f32 %v702, 0.0
    %v714 = vmax.f32 %v704, 0.0
    %v715 = vmax.f32 %v706, 0.0
    %716 = vmatprep.subr.bf16.mxu0 %v624
    %717 = vmatpush1.bf16.msra.mxu0 %v623
    %718 = vmatprep.subr.bf16.mxu0 %v626
    %719 = vmatpush1.bf16.msra.mxu0 %v625
    %720 = vmatprep.subr.bf16.mxu0 %v628
    %721 = vmatpush1.bf16.msra.mxu0 %v627
    %722 = vmatprep.subr.bf16.mxu0 %v630
    %723 = vmatpush1.bf16.msra.mxu0 %v629
    %724 = vmatprep.subr.bf16.mxu0 %v632
    %725 = vmatpush1.bf16.msra.mxu0 %v631
    %726 = vmatprep.subr.bf16.mxu0 %v634
    %727 = vmatpush1.bf16.msra.mxu0 %v633
    %728 = vmatprep.subr.bf16.mxu0 %v636
    %729 = vmatpush1.bf16.msra.mxu0 %v635
    %730 = vmatprep.subr.bf16.mxu0 %v638
    %731 = vmatpush1.bf16.msra.mxu0 %v637
    %732 = vmatprep.subr.bf16.mxu0 0
    %733 = vmatpush1.bf16.msra.mxu0 0
    %734 = vmatprep.subr.bf16.mxu0 0
    %735 = vmatpush1.bf16.msra.mxu0 0
    %736 = vmatprep.subr.bf16.mxu0 0
    %737 = vmatpush1.bf16.msra.mxu0 0
    %738 = vmatprep.subr.bf16.mxu0 0
    %739 = vmatpush1.bf16.msra.mxu0 0
    %740 = vmatprep.subr.bf16.mxu0 0
    %741 = vmatpush1.bf16.msra.mxu0 0
    %742 = vmatprep.subr.bf16.mxu0 0
    %743 = vmatpush1.bf16.msra.mxu0 0
    %744 = vmatprep.subr.bf16.mxu0 0
    %745 = vmatpush1.bf16.msra.mxu0 0
    %746 = vmatprep.subr.bf16.mxu0 0
    %747 = vmatpush1.bf16.msra.mxu0 0
    %748 = vmatprep.mubr.bf16.mxu0 0
    %749 = vmatmul.mubr.bf16.gmra.mrb[0].mxu0 %v543
    %v750 = vpop.f32.mrb[0].mxu0
    %v751 = vadd.f32 %v568, %v750
    %v752 = vpop.f32.mrb[0].mxu0
    %v753 = vadd.f32 %v572, %v752
    %v754 = vpop.f32.mrb[0].mxu0
    %v755 = vadd.f32 %v568, %v754
    %v756 = vpop.f32.mrb[0].mxu0
    %v757 = vadd.f32 %v572, %v756
    %758 = vmatprep.mubr.bf16.mxu0 0
    %759 = vmatmul.mubr.bf16.gmra.mrb[0].mxu0 %v544
    %v760 = vpop.f32.mrb[0].mxu0
    %v761 = vadd.f32 %v568, %v760
    %v762 = vpop.f32.mrb[0].mxu0
    %v763 = vadd.f32 %v572, %v762
    %v764 = vpop.f32.mrb[0].mxu0
    %v765 = vadd.f32 %v568, %v764
    %v766 = vpop.f32.mrb[0].mxu0
    %v767 = vadd.f32 %v572, %v766
    %768 = vdwg.mxu0
    %v769 = vmax.f32 %v751, 0.0
    %v770 = vmax.f32 %v753, 0.0
    %v771 = vmax.f32 %v755, 0.0
    %v772 = vmax.f32 %v757, 0.0
    %v773 = vmax.f32 %v761, 0.0
    %v774 = vmax.f32 %v763, 0.0
    %v775 = vmax.f32 %v765, 0.0
    %v776 = vmax.f32 %v767, 0.0
    %v777 = vpack.c.bf16 %v710, %v708
    %v778 = vpack.c.bf16 %v711, %v709
    %v779 = vpack.c.bf16 %v714, %v712
    %v780 = vpack.c.bf16 %v715, %v713
    %v781 = vpack.c.bf16 %v771, %v769
    %v782 = vpack.c.bf16 %v772, %v770
    %v783 = vpack.c.bf16 %v775, %v773
    %v784 = vpack.c.bf16 %v776, %v774
    %s785 = scalar_lea.vmem [#allocation2], 1024
    %v786 = vld [vmem:[%s785] sm:$0xf]
    %v787 = vld [vmem:[%s785 + $0x8] sm:$0xf]
    %v788 = vld [vmem:[%s785 + $0x10] sm:$0xf]
    %v789 = vld [vmem:[%s785 + $0x18] sm:$0xf]
    %v790 = vld [vmem:[%s785 + $0x20] sm:$0xf]
    %v791 = vld [vmem:[%s785 + $0x28] sm:$0xf]
    %v792 = vld [vmem:[%s785 + $0x30] sm:$0xf]
    %v793 = vld [vmem:[%s785 + $0x38] sm:$0xf]
    %v794 = vld [vmem:[%s785 + $0x40] sm:$0xf]
    %v795 = vld [vmem:[%s785 + $0x48] sm:$0xf]
    %v796 = vld [vmem:[%s785 + $0x50] sm:$0xf]
    %v797 = vld [vmem:[%s785 + $0x58] sm:$0xf]
    %v798 = vld [vmem:[%s785 + $0x60] sm:$0xf]
    %v799 = vld [vmem:[%s785 + $0x68] sm:$0xf]
    %v800 = vld [vmem:[%s785 + $0x70] sm:$0xf]
    %v801 = vld [vmem:[%s785 + $0x78] sm:$0xf]
    %v802 = vld [vmem:[%s785 + $0x80] sm:$0xf]
    %v803 = vld [vmem:[%s785 + $0x88] sm:$0xf]
    %v804 = vld [vmem:[%s785 + $0x90] sm:$0xf]
    %v805 = vld [vmem:[%s785 + $0x98] sm:$0xf]
    %v806 = vld [vmem:[%s785 + $0xa0] sm:$0xf]
    %v807 = vld [vmem:[%s785 + $0xa8] sm:$0xf]
    %v808 = vld [vmem:[%s785 + $0xb0] sm:$0xf]
    %v809 = vld [vmem:[%s785 + $0xb8] sm:$0xf]
    %v810 = vld [vmem:[%s785 + $0xc0] sm:$0xf]
    %v811 = vld [vmem:[%s785 + $0xc8] sm:$0xf]
    %v812 = vld [vmem:[%s785 + $0xd0] sm:$0xf]
    %v813 = vld [vmem:[%s785 + $0xd8] sm:$0xf]
    %v814 = vld [vmem:[%s785 + $0xe0] sm:$0xf]
    %v815 = vld [vmem:[%s785 + $0xe8] sm:$0xf]
    %v816 = vld [vmem:[%s785 + $0xf0] sm:$0xf]
    %v817 = vld [vmem:[%s785 + $0xf8] sm:$0xf]
    %s818 = scalar_lea.vmem %s2, 8
    %v819 = vld [vmem:[%s818] sm:$0x1]
    %v821 = vlaneseq
    %v822 = vshrl.u32 %v821, 7
    %v823 = vsub.s32 0, %v822
    %v824 = vrot.slane %v819, %v823
    %v858 = vunpack.c.l.b16 %v786
    %v859 = vunpack.c.l.b16 %v787
    %v860 = vunpack.c.l.b16 %v788
    %v861 = vunpack.c.l.b16 %v789
    %v862 = vunpack.c.l.b16 %v790
    %v863 = vunpack.c.l.b16 %v791
    %v864 = vunpack.c.l.b16 %v792
    %v865 = vunpack.c.l.b16 %v793
    %v866 = vunpack.c.l.b16 %v794
    %v867 = vunpack.c.l.b16 %v795
    %v868 = vunpack.c.l.b16 %v796
    %v869 = vunpack.c.l.b16 %v797
    %v870 = vunpack.c.l.b16 %v798
    %v871 = vunpack.c.l.b16 %v799
    %v872 = vunpack.c.l.b16 %v800
    %v873 = vunpack.c.l.b16 %v801
    %v874 = vunpack.c.l.b16 %v802
    %v875 = vunpack.c.l.b16 %v803
    %v876 = vunpack.c.l.b16 %v804
    %v877 = vunpack.c.l.b16 %v805
    %v878 = vunpack.c.l.b16 %v806
    %v879 = vunpack.c.l.b16 %v807
    %v880 = vunpack.c.l.b16 %v808
    %v881 = vunpack.c.l.b16 %v809
    %v882 = vunpack.c.l.b16 %v810
    %v883 = vunpack.c.l.b16 %v811
    %v884 = vunpack.c.l.b16 %v812
    %v885 = vunpack.c.l.b16 %v813
    %v886 = vunpack.c.l.b16 %v814
    %v887 = vunpack.c.l.b16 %v815
    %v888 = vunpack.c.l.b16 %v816
    %v889 = vunpack.c.l.b16 %v817
    %v890 = vpack.c.b16 %v859, %v858
    %v891 = vpack.c.b16 %v861, %v860
    %v892 = vpack.c.b16 %v863, %v862
    %v893 = vpack.c.b16 %v865, %v864
    %v894 = vpack.c.b16 %v867, %v866
    %v895 = vpack.c.b16 %v869, %v868
    %v896 = vpack.c.b16 %v871, %v870
    %v897 = vpack.c.b16 %v873, %v872
    %v898 = vpack.c.b16 %v875, %v874
    %v899 = vpack.c.b16 %v877, %v876
    %v900 = vpack.c.b16 %v879, %v878
    %v901 = vpack.c.b16 %v881, %v880
    %v902 = vpack.c.b16 %v883, %v882
    %v903 = vpack.c.b16 %v885, %v884
    %v904 = vpack.c.b16 %v887, %v886
    %v905 = vpack.c.b16 %v889, %v888
    %922 = vmatprep.subr.bf16.mxu0 0
    %923 = vmatpush1.bf16.msra.mxu0 %v890
    %924 = vmatprep.subr.bf16.mxu0 0
    %925 = vmatpush1.bf16.msra.mxu0 %v891
    %926 = vmatprep.subr.bf16.mxu0 0
    %927 = vmatpush1.bf16.msra.mxu0 %v892
    %928 = vmatprep.subr.bf16.mxu0 0
    %929 = vmatpush1.bf16.msra.mxu0 %v893
    %930 = vmatprep.subr.bf16.mxu0 0
    %931 = vmatpush1.bf16.msra.mxu0 %v894
    %932 = vmatprep.subr.bf16.mxu0 0
    %933 = vmatpush1.bf16.msra.mxu0 %v895
    %934 = vmatprep.subr.bf16.mxu0 0
    %935 = vmatpush1.bf16.msra.mxu0 %v896
    %936 = vmatprep.subr.bf16.mxu0 0
    %937 = vmatpush1.bf16.msra.mxu0 %v897
    %938 = vmatprep.subr.bf16.mxu0 0
    %939 = vmatpush1.bf16.msra.mxu0 %v898
    %940 = vmatprep.subr.bf16.mxu0 0
    %941 = vmatpush1.bf16.msra.mxu0 %v899
    %942 = vmatprep.subr.bf16.mxu0 0
    %943 = vmatpush1.bf16.msra.mxu0 %v900
    %944 = vmatprep.subr.bf16.mxu0 0
    %945 = vmatpush1.bf16.msra.mxu0 %v901
    %946 = vmatprep.subr.bf16.mxu0 0
    %947 = vmatpush1.bf16.msra.mxu0 %v902
    %948 = vmatprep.subr.bf16.mxu0 0
    %949 = vmatpush1.bf16.msra.mxu0 %v903
    %950 = vmatprep.subr.bf16.mxu0 0
    %951 = vmatpush1.bf16.msra.mxu0 %v904
    %952 = vmatprep.subr.bf16.mxu0 0
    %953 = vmatpush1.bf16.msra.mxu0 %v905
    %954 = vmatprep.mubr.bf16.mxu0 %v778
    %955 = vmatmul.mubr.bf16.gmra.mrb[0].mxu0 %v777
    %v956 = vpop.f32.mrb[0].mxu0
    %v957 = vadd.f32 %v824, %v956
    %v958 = vpop.f32.mrb[0].mxu0
    %v959 = vpop.f32.mrb[0].mxu0
    %v960 = vadd.f32 %v824, %v959
    %v961 = vpop.f32.mrb[0].mxu0
    %962 = vmatprep.mubr.bf16.mxu0 %v780
    %963 = vmatmul.mubr.bf16.gmra.mrb[0].mxu0 %v779
    %v964 = vpop.f32.mrb[0].mxu0
    %v965 = vadd.f32 %v824, %v964
    %v966 = vpop.f32.mrb[0].mxu0
    %v967 = vpop.f32.mrb[0].mxu0
    %v968 = vadd.f32 %v824, %v967
    %v969 = vpop.f32.mrb[0].mxu0
    %970 = vdwg.mxu0
    %v971 = vmax.f32 %v957, 0.0
    %v972 = vmax.f32 %v960, 0.0
    %v973 = vmax.f32 %v965, 0.0
    %v974 = vmax.f32 %v968, 0.0
    %975 = vmatprep.subr.bf16.mxu0 0
    %976 = vmatpush1.bf16.msra.mxu0 %v890
    %977 = vmatprep.subr.bf16.mxu0 0
    %978 = vmatpush1.bf16.msra.mxu0 %v891
    %979 = vmatprep.subr.bf16.mxu0 0
    %980 = vmatpush1.bf16.msra.mxu0 %v892
    %981 = vmatprep.subr.bf16.mxu0 0
    %982 = vmatpush1.bf16.msra.mxu0 %v893
    %983 = vmatprep.subr.bf16.mxu0 0
    %984 = vmatpush1.bf16.msra.mxu0 %v894
    %985 = vmatprep.subr.bf16.mxu0 0
    %986 = vmatpush1.bf16.msra.mxu0 %v895
    %987 = vmatprep.subr.bf16.mxu0 0
    %988 = vmatpush1.bf16.msra.mxu0 %v896
    %989 = vmatprep.subr.bf16.mxu0 0
    %990 = vmatpush1.bf16.msra.mxu0 %v897
    %991 = vmatprep.subr.bf16.mxu0 0
    %992 = vmatpush1.bf16.msra.mxu0 %v898
    %993 = vmatprep.subr.bf16.mxu0 0
    %994 = vmatpush1.bf16.msra.mxu0 %v899
    %995 = vmatprep.subr.bf16.mxu0 0
    %996 = vmatpush1.bf16.msra.mxu0 %v900
    %997 = vmatprep.subr.bf16.mxu0 0
    %998 = vmatpush1.bf16.msra.mxu0 %v901
    %999 = vmatprep.subr.bf16.mxu0 0
    %1000 = vmatpush1.bf16.msra.mxu0 %v902
    %1001 = vmatprep.subr.bf16.mxu0 0
    %1002 = vmatpush1.bf16.msra.mxu0 %v903
    %1003 = vmatprep.subr.bf16.mxu0 0
    %1004 = vmatpush1.bf16.msra.mxu0 %v904
    %1005 = vmatprep.subr.bf16.mxu0 0
    %1006 = vmatpush1.bf16.msra.mxu0 %v905
    %1007 = vmatprep.mubr.bf16.mxu0 %v782
    %1008 = vmatmul.mubr.bf16.gmra.mrb[0].mxu0 %v781
    %v1009 = vpop.f32.mrb[0].mxu0
    %v1010 = vadd.f32 %v824, %v1009
    %v1011 = vpop.f32.mrb[0].mxu0
    %v1012 = vpop.f32.mrb[0].mxu0
    %v1013 = vadd.f32 %v824, %v1012
    %v1014 = vpop.f32.mrb[0].mxu0
    %1015 = vmatprep.mubr.bf16.mxu0 %v784
    %1016 = vmatmul.mubr.bf16.gmra.mrb[0].mxu0 %v783
    %v1017 = vpop.f32.mrb[0].mxu0
    %v1018 = vadd.f32 %v824, %v1017
    %v1019 = vpop.f32.mrb[0].mxu0
    %v1020 = vpop.f32.mrb[0].mxu0
    %v1021 = vadd.f32 %v824, %v1020
    %v1022 = vpop.f32.mrb[0].mxu0
    %1023 = vdwg.mxu0
    %v1024 = vmax.f32 %v1010, 0.0
    %v1025 = vmax.f32 %v1013, 0.0
    %v1026 = vmax.f32 %v1018, 0.0
    %v1027 = vmax.f32 %v1021, 0.0
    %v1028 = vpack.c.bf16 %v972, %v971
    %v1029 = vpack.c.bf16 %v974, %v973
    %v1030 = vpack.c.bf16 %v1025, %v1024
    %v1031 = vpack.c.bf16 %v1027, %v1026
    %s1032 = scalar_lea.vmem [#allocation2], 1280
    %v1033 = vld [vmem:[%s1032] sm:$0xf]
    %v1034 = vld [vmem:[%s1032 + $0x8] sm:$0xf]
    %v1035 = vld [vmem:[%s1032 + $0x10] sm:$0xf]
    %v1036 = vld [vmem:[%s1032 + $0x18] sm:$0xf]
    %v1037 = vld [vmem:[%s1032 + $0x20] sm:$0xf]
    %v1038 = vld [vmem:[%s1032 + $0x28] sm:$0xf]
    %v1039 = vld [vmem:[%s1032 + $0x30] sm:$0xf]
    %v1040 = vld [vmem:[%s1032 + $0x38] sm:$0xf]
    %v1041 = vld [vmem:[%s1032 + $0x40] sm:$0xf]
    %v1042 = vld [vmem:[%s1032 + $0x48] sm:$0xf]
    %v1043 = vld [vmem:[%s1032 + $0x50] sm:$0xf]
    %v1044 = vld [vmem:[%s1032 + $0x58] sm:$0xf]
    %v1045 = vld [vmem:[%s1032 + $0x60] sm:$0xf]
    %v1046 = vld [vmem:[%s1032 + $0x68] sm:$0xf]
    %v1047 = vld [vmem:[%s1032 + $0x70] sm:$0xf]
    %v1048 = vld [vmem:[%s1032 + $0x78] sm:$0xf]
    %s1049 = scalar_lea.vmem %s2, 10
    %v1050 = vld [vmem:[%s1049] sm:$0x1]
    %v1052 = vlaneseq
    %v1053 = vshrl.u32 %v1052, 7
    %v1054 = vsub.s32 0, %v1053
    %v1055 = vrot.slane %v1050, %v1054
    %v1073 = vunpack.c.l.b16 %v1033
    %v1074 = vunpack.c.l.b16 %v1034
    %v1075 = vunpack.c.l.b16 %v1035
    %v1076 = vunpack.c.l.b16 %v1036
    %v1077 = vunpack.c.l.b16 %v1037
    %v1078 = vunpack.c.l.b16 %v1038
    %v1079 = vunpack.c.l.b16 %v1039
    %v1080 = vunpack.c.l.b16 %v1040
    %v1081 = vunpack.c.l.b16 %v1041
    %v1082 = vunpack.c.l.b16 %v1042
    %v1083 = vunpack.c.l.b16 %v1043
    %v1084 = vunpack.c.l.b16 %v1044
    %v1085 = vunpack.c.l.b16 %v1045
    %v1086 = vunpack.c.l.b16 %v1046
    %v1087 = vunpack.c.l.b16 %v1047
    %v1088 = vunpack.c.l.b16 %v1048
    %v1089 = vpack.c.b16 %v1074, %v1073
    %v1090 = vpack.c.b16 %v1076, %v1075
    %v1091 = vpack.c.b16 %v1078, %v1077
    %v1092 = vpack.c.b16 %v1080, %v1079
    %v1093 = vpack.c.b16 %v1082, %v1081
    %v1094 = vpack.c.b16 %v1084, %v1083
    %v1095 = vpack.c.b16 %v1086, %v1085
    %v1096 = vpack.c.b16 %v1088, %v1087
    %1105 = vmatprep.subr.bf16.mxu0 0
    %1106 = vmatpush1.bf16.msra.mxu0 %v1089
    %1107 = vmatprep.subr.bf16.mxu0 0
    %1108 = vmatpush1.bf16.msra.mxu0 %v1090
    %1109 = vmatprep.subr.bf16.mxu0 0
    %1110 = vmatpush1.bf16.msra.mxu0 %v1091
    %1111 = vmatprep.subr.bf16.mxu0 0
    %1112 = vmatpush1.bf16.msra.mxu0 %v1092
    %1113 = vmatprep.subr.bf16.mxu0 0
    %1114 = vmatpush1.bf16.msra.mxu0 %v1093
    %1115 = vmatprep.subr.bf16.mxu0 0
    %1116 = vmatpush1.bf16.msra.mxu0 %v1094
    %1117 = vmatprep.subr.bf16.mxu0 0
    %1118 = vmatpush1.bf16.msra.mxu0 %v1095
    %1119 = vmatprep.subr.bf16.mxu0 0
    %1120 = vmatpush1.bf16.msra.mxu0 %v1096
    %1121 = vmatprep.subr.bf16.mxu0 0
    %1122 = vmatpush1.bf16.msra.mxu0 0
    %1123 = vmatprep.subr.bf16.mxu0 0
    %1124 = vmatpush1.bf16.msra.mxu0 0
    %1125 = vmatprep.subr.bf16.mxu0 0
    %1126 = vmatpush1.bf16.msra.mxu0 0
    %1127 = vmatprep.subr.bf16.mxu0 0
    %1128 = vmatpush1.bf16.msra.mxu0 0
    %1129 = vmatprep.subr.bf16.mxu0 0
    %1130 = vmatpush1.bf16.msra.mxu0 0
    %1131 = vmatprep.subr.bf16.mxu0 0
    %1132 = vmatpush1.bf16.msra.mxu0 0
    %1133 = vmatprep.subr.bf16.mxu0 0
    %1134 = vmatpush1.bf16.msra.mxu0 0
    %1135 = vmatprep.subr.bf16.mxu0 0
    %1136 = vmatpush1.bf16.msra.mxu0 0
    %1137 = vmatprep.mubr.bf16.mxu0 0
    %1138 = vmatmul.mubr.bf16.gmra.mrb[0].mxu0 %v1028
    %v1139 = vpop.f32.mrb[0].mxu0
    %v1140 = vadd.f32 %v1055, %v1139
    %v1141 = vpop.f32.mrb[0].mxu0
    %v1142 = vpop.f32.mrb[0].mxu0
    %v1143 = vadd.f32 %v1055, %v1142
    %v1144 = vpop.f32.mrb[0].mxu0
    %1145 = vmatprep.mubr.bf16.mxu0 0
    %1146 = vmatmul.mubr.bf16.gmra.mrb[0].mxu0 %v1029
    %v1147 = vpop.f32.mrb[0].mxu0
    %v1148 = vadd.f32 %v1055, %v1147
    %v1149 = vpop.f32.mrb[0].mxu0
    %v1150 = vpop.f32.mrb[0].mxu0
    %v1151 = vadd.f32 %v1055, %v1150
    %v1152 = vpop.f32.mrb[0].mxu0
    %1153 = vdwg.mxu0
    %v1154 = vmax.f32 %v1140, 0.0
    %v1155 = vmax.f32 %v1143, 0.0
    %v1156 = vmax.f32 %v1148, 0.0
    %v1157 = vmax.f32 %v1151, 0.0
    %1158 = vmatprep.subr.bf16.mxu0 0
    %1159 = vmatpush1.bf16.msra.mxu0 %v1089
    %1160 = vmatprep.subr.bf16.mxu0 0
    %1161 = vmatpush1.bf16.msra.mxu0 %v1090
    %1162 = vmatprep.subr.bf16.mxu0 0
    %1163 = vmatpush1.bf16.msra.mxu0 %v1091
    %1164 = vmatprep.subr.bf16.mxu0 0
    %1165 = vmatpush1.bf16.msra.mxu0 %v1092
    %1166 = vmatprep.subr.bf16.mxu0 0
    %1167 = vmatpush1.bf16.msra.mxu0 %v1093
    %1168 = vmatprep.subr.bf16.mxu0 0
    %1169 = vmatpush1.bf16.msra.mxu0 %v1094
    %1170 = vmatprep.subr.bf16.mxu0 0
    %1171 = vmatpush1.bf16.msra.mxu0 %v1095
    %1172 = vmatprep.subr.bf16.mxu0 0
    %1173 = vmatpush1.bf16.msra.mxu0 %v1096
    %1174 = vmatprep.subr.bf16.mxu0 0
    %1175 = vmatpush1.bf16.msra.mxu0 0
    %1176 = vmatprep.subr.bf16.mxu0 0
    %1177 = vmatpush1.bf16.msra.mxu0 0
    %1178 = vmatprep.subr.bf16.mxu0 0
    %1179 = vmatpush1.bf16.msra.mxu0 0
    %1180 = vmatprep.subr.bf16.mxu0 0
    %1181 = vmatpush1.bf16.msra.mxu0 0
    %1182 = vmatprep.subr.bf16.mxu0 0
    %1183 = vmatpush1.bf16.msra.mxu0 0
    %1184 = vmatprep.subr.bf16.mxu0 0
    %1185 = vmatpush1.bf16.msra.mxu0 0
    %1186 = vmatprep.subr.bf16.mxu0 0
    %1187 = vmatpush1.bf16.msra.mxu0 0
    %1188 = vmatprep.subr.bf16.mxu0 0
    %1189 = vmatpush1.bf16.msra.mxu0 0
    %1190 = vmatprep.mubr.bf16.mxu0 0
    %1191 = vmatmul.mubr.bf16.gmra.mrb[0].mxu0 %v1030
    %v1192 = vpop.f32.mrb[0].mxu0
    %v1193 = vadd.f32 %v1055, %v1192
    %v1194 = vpop.f32.mrb[0].mxu0
    %v1195 = vpop.f32.mrb[0].mxu0
    %v1196 = vadd.f32 %v1055, %v1195
    %v1197 = vpop.f32.mrb[0].mxu0
    %1198 = vmatprep.mubr.bf16.mxu0 0
    %1199 = vmatmul.mubr.bf16.gmra.mrb[0].mxu0 %v1031
    %v1200 = vpop.f32.mrb[0].mxu0
    %v1201 = vadd.f32 %v1055, %v1200
    %v1202 = vpop.f32.mrb[0].mxu0
    %v1203 = vpop.f32.mrb[0].mxu0
    %v1204 = vadd.f32 %v1055, %v1203
    %v1205 = vpop.f32.mrb[0].mxu0
    %1206 = vdwg.mxu0
    %v1207 = vmax.f32 %v1193, 0.0
    %v1208 = vmax.f32 %v1196, 0.0
    %v1209 = vmax.f32 %v1201, 0.0
    %v1210 = vmax.f32 %v1204, 0.0
    %v1211 = vpack.c.bf16 %v1155, %v1154
    %v1212 = vpack.c.bf16 %v1157, %v1156
    %v1213 = vpack.c.bf16 %v1208, %v1207
    %v1214 = vpack.c.bf16 %v1210, %v1209
    %s1215 = scalar_lea.vmem [#allocation2], 1536
    %v1216 = vld [vmem:[%s1215] sm:$0xf]
    %v1217 = vld [vmem:[%s1215 + $0x8] sm:$0xf]
    %v1218 = vld [vmem:[%s1215 + $0x10] sm:$0xf]
    %v1219 = vld [vmem:[%s1215 + $0x18] sm:$0xf]
    %v1220 = vld [vmem:[%s1215 + $0x20] sm:$0xf]
    %v1221 = vld [vmem:[%s1215 + $0x28] sm:$0xf]
    %v1222 = vld [vmem:[%s1215 + $0x30] sm:$0xf]
    %v1223 = vld [vmem:[%s1215 + $0x38] sm:$0xf]
    %v1224 = vld [vmem:[%s1215 + $0x40] sm:$0xf]
    %v1225 = vld [vmem:[%s1215 + $0x48] sm:$0xf]
    %v1226 = vld [vmem:[%s1215 + $0x50] sm:$0xf]
    %v1227 = vld [vmem:[%s1215 + $0x58] sm:$0xf]
    %v1228 = vld [vmem:[%s1215 + $0x60] sm:$0xf]
    %v1229 = vld [vmem:[%s1215 + $0x68] sm:$0xf]
    %v1230 = vld [vmem:[%s1215 + $0x70] sm:$0xf]
    %v1231 = vld [vmem:[%s1215 + $0x78] sm:$0xf]
    %s1232 = scalar_lea.vmem %s2, 12
    %v1233 = vld [vmem:[%s1232] sm:$0x1]
    %v1235 = vlaneseq
    %v1236 = vshrl.u32 %v1235, 7
    %v1237 = vsub.s32 0, %v1236
    %v1238 = vrot.slane %v1233, %v1237
    %v1256 = vunpack.c.l.b16 %v1216
    %v1257 = vunpack.c.l.b16 %v1217
    %v1258 = vunpack.c.l.b16 %v1218
    %v1259 = vunpack.c.l.b16 %v1219
    %v1260 = vunpack.c.l.b16 %v1220
    %v1261 = vunpack.c.l.b16 %v1221
    %v1262 = vunpack.c.l.b16 %v1222
    %v1263 = vunpack.c.l.b16 %v1223
    %v1264 = vunpack.c.l.b16 %v1224
    %v1265 = vunpack.c.l.b16 %v1225
    %v1266 = vunpack.c.l.b16 %v1226
    %v1267 = vunpack.c.l.b16 %v1227
    %v1268 = vunpack.c.l.b16 %v1228
    %v1269 = vunpack.c.l.b16 %v1229
    %v1270 = vunpack.c.l.b16 %v1230
    %v1271 = vunpack.c.l.b16 %v1231
    %v1272 = vpack.c.b16 %v1257, %v1256
    %v1273 = vpack.c.b16 %v1259, %v1258
    %v1274 = vpack.c.b16 %v1261, %v1260
    %v1275 = vpack.c.b16 %v1263, %v1262
    %v1276 = vpack.c.b16 %v1265, %v1264
    %v1277 = vpack.c.b16 %v1267, %v1266
    %v1278 = vpack.c.b16 %v1269, %v1268
    %v1279 = vpack.c.b16 %v1271, %v1270
    %1288 = vmatprep.subr.bf16.mxu0 0
    %1289 = vmatpush1.bf16.msra.mxu0 %v1272
    %1290 = vmatprep.subr.bf16.mxu0 0
    %1291 = vmatpush1.bf16.msra.mxu0 %v1273
    %1292 = vmatprep.subr.bf16.mxu0 0
    %1293 = vmatpush1.bf16.msra.mxu0 %v1274
    %1294 = vmatprep.subr.bf16.mxu0 0
    %1295 = vmatpush1.bf16.msra.mxu0 %v1275
    %1296 = vmatprep.subr.bf16.mxu0 0
    %1297 = vmatpush1.bf16.msra.mxu0 %v1276
    %1298 = vmatprep.subr.bf16.mxu0 0
    %1299 = vmatpush1.bf16.msra.mxu0 %v1277
    %1300 = vmatprep.subr.bf16.mxu0 0
    %1301 = vmatpush1.bf16.msra.mxu0 %v1278
    %1302 = vmatprep.subr.bf16.mxu0 0
    %1303 = vmatpush1.bf16.msra.mxu0 %v1279
    %1304 = vmatprep.subr.bf16.mxu0 0
    %1305 = vmatpush1.bf16.msra.mxu0 0
    %1306 = vmatprep.subr.bf16.mxu0 0
    %1307 = vmatpush1.bf16.msra.mxu0 0
    %1308 = vmatprep.subr.bf16.mxu0 0
    %1309 = vmatpush1.bf16.msra.mxu0 0
    %1310 = vmatprep.subr.bf16.mxu0 0
    %1311 = vmatpush1.bf16.msra.mxu0 0
    %1312 = vmatprep.subr.bf16.mxu0 0
    %1313 = vmatpush1.bf16.msra.mxu0 0
    %1314 = vmatprep.subr.bf16.mxu0 0
    %1315 = vmatpush1.bf16.msra.mxu0 0
    %1316 = vmatprep.subr.bf16.mxu0 0
    %1317 = vmatpush1.bf16.msra.mxu0 0
    %1318 = vmatprep.subr.bf16.mxu0 0
    %1319 = vmatpush1.bf16.msra.mxu0 0
    %1320 = vmatprep.mubr.bf16.mxu0 0
    %1321 = vmatmul.mubr.bf16.gmra.mrb[0].mxu0 %v1211
    %v1322 = vpop.f32.mrb[0].mxu0
    %v1323 = vadd.f32 %v1238, %v1322
    %v1324 = vpop.f32.mrb[0].mxu0
    %v1325 = vpop.f32.mrb[0].mxu0
    %v1326 = vadd.f32 %v1238, %v1325
    %v1327 = vpop.f32.mrb[0].mxu0
    %1328 = vmatprep.mubr.bf16.mxu0 0
    %1329 = vmatmul.mubr.bf16.gmra.mrb[0].mxu0 %v1212
    %v1330 = vpop.f32.mrb[0].mxu0
    %v1331 = vadd.f32 %v1238, %v1330
    %v1332 = vpop.f32.mrb[0].mxu0
    %v1333 = vpop.f32.mrb[0].mxu0
    %v1334 = vadd.f32 %v1238, %v1333
    %v1335 = vpop.f32.mrb[0].mxu0
    %1336 = vdwg.mxu0
    %v1337 = vmax.f32 %v1323, 0.0
    %v1338 = vmax.f32 %v1326, 0.0
    %v1339 = vmax.f32 %v1331, 0.0
    %v1340 = vmax.f32 %v1334, 0.0
    %1341 = vmatprep.subr.bf16.mxu0 0
    %1342 = vmatpush1.bf16.msra.mxu0 %v1272
    %1343 = vmatprep.subr.bf16.mxu0 0
    %1344 = vmatpush1.bf16.msra.mxu0 %v1273
    %1345 = vmatprep.subr.bf16.mxu0 0
    %1346 = vmatpush1.bf16.msra.mxu0 %v1274
    %1347 = vmatprep.subr.bf16.mxu0 0
    %1348 = vmatpush1.bf16.msra.mxu0 %v1275
    %1349 = vmatprep.subr.bf16.mxu0 0
    %1350 = vmatpush1.bf16.msra.mxu0 %v1276
    %1351 = vmatprep.subr.bf16.mxu0 0
    %1352 = vmatpush1.bf16.msra.mxu0 %v1277
    %1353 = vmatprep.subr.bf16.mxu0 0
    %1354 = vmatpush1.bf16.msra.mxu0 %v1278
    %1355 = vmatprep.subr.bf16.mxu0 0
    %1356 = vmatpush1.bf16.msra.mxu0 %v1279
    %1357 = vmatprep.subr.bf16.mxu0 0
    %1358 = vmatpush1.bf16.msra.mxu0 0
    %1359 = vmatprep.subr.bf16.mxu0 0
    %1360 = vmatpush1.bf16.msra.mxu0 0
    %1361 = vmatprep.subr.bf16.mxu0 0
    %1362 = vmatpush1.bf16.msra.mxu0 0
    %1363 = vmatprep.subr.bf16.mxu0 0
    %1364 = vmatpush1.bf16.msra.mxu0 0
    %1365 = vmatprep.subr.bf16.mxu0 0
    %1366 = vmatpush1.bf16.msra.mxu0 0
    %1367 = vmatprep.subr.bf16.mxu0 0
    %1368 = vmatpush1.bf16.msra.mxu0 0
    %1369 = vmatprep.subr.bf16.mxu0 0
    %1370 = vmatpush1.bf16.msra.mxu0 0
    %1371 = vmatprep.subr.bf16.mxu0 0
    %1372 = vmatpush1.bf16.msra.mxu0 0
    %1373 = vmatprep.mubr.bf16.mxu0 0
    %1374 = vmatmul.mubr.bf16.gmra.mrb[0].mxu0 %v1213
    %v1375 = vpop.f32.mrb[0].mxu0
    %v1376 = vadd.f32 %v1238, %v1375
    %v1377 = vpop.f32.mrb[0].mxu0
    %v1378 = vpop.f32.mrb[0].mxu0
    %v1379 = vadd.f32 %v1238, %v1378
    %v1380 = vpop.f32.mrb[0].mxu0
    %1381 = vmatprep.mubr.bf16.mxu0 0
    %1382 = vmatmul.mubr.bf16.gmra.mrb[0].mxu0 %v1214
    %v1383 = vpop.f32.mrb[0].mxu0
    %v1384 = vadd.f32 %v1238, %v1383
    %v1385 = vpop.f32.mrb[0].mxu0
    %v1386 = vpop.f32.mrb[0].mxu0
    %v1387 = vadd.f32 %v1238, %v1386
    %v1388 = vpop.f32.mrb[0].mxu0
    %1389 = vdwg.mxu0
    %v1390 = vmax.f32 %v1376, 0.0
    %v1391 = vmax.f32 %v1379, 0.0
    %v1392 = vmax.f32 %v1384, 0.0
    %v1393 = vmax.f32 %v1387, 0.0
    %v1394 = vpack.c.bf16 %v1338, %v1337
    %v1395 = vpack.c.bf16 %v1340, %v1339
    %v1396 = vpack.c.bf16 %v1391, %v1390
    %v1397 = vpack.c.bf16 %v1393, %v1392
    %s1398 = scalar_lea.vmem [#allocation2], 1792
    %v1399 = vld [vmem:[%s1398] sm:$0xf]
    %v1400 = vld [vmem:[%s1398 + $0x8] sm:$0xf]
    %v1401 = vld [vmem:[%s1398 + $0x10] sm:$0xf]
    %v1402 = vld [vmem:[%s1398 + $0x18] sm:$0xf]
    %v1403 = vld [vmem:[%s1398 + $0x20] sm:$0xf]
    %v1404 = vld [vmem:[%s1398 + $0x28] sm:$0xf]
    %v1405 = vld [vmem:[%s1398 + $0x30] sm:$0xf]
    %v1406 = vld [vmem:[%s1398 + $0x38] sm:$0xf]
    %v1407 = vld [vmem:[%s1398 + $0x40] sm:$0xf]
    %v1408 = vld [vmem:[%s1398 + $0x48] sm:$0xf]
    %v1409 = vld [vmem:[%s1398 + $0x50] sm:$0xf]
    %v1410 = vld [vmem:[%s1398 + $0x58] sm:$0xf]
    %v1411 = vld [vmem:[%s1398 + $0x60] sm:$0xf]
    %v1412 = vld [vmem:[%s1398 + $0x68] sm:$0xf]
    %v1413 = vld [vmem:[%s1398 + $0x70] sm:$0xf]
    %v1414 = vld [vmem:[%s1398 + $0x78] sm:$0xf]
    %s1415 = scalar_lea.vmem %s2, 14
    %v1416 = vld [vmem:[%s1415] sm:$0x1]
    %v1418 = vlaneseq
    %v1419 = vshrl.u32 %v1418, 7
    %v1420 = vsub.s32 0, %v1419
    %v1421 = vrot.slane %v1416, %v1420
    %v1439 = vunpack.c.l.b16 %v1399
    %v1440 = vunpack.c.l.b16 %v1400
    %v1441 = vunpack.c.l.b16 %v1401
    %v1442 = vunpack.c.l.b16 %v1402
    %v1443 = vunpack.c.l.b16 %v1403
    %v1444 = vunpack.c.l.b16 %v1404
    %v1445 = vunpack.c.l.b16 %v1405
    %v1446 = vunpack.c.l.b16 %v1406
    %v1447 = vunpack.c.l.b16 %v1407
    %v1448 = vunpack.c.l.b16 %v1408
    %v1449 = vunpack.c.l.b16 %v1409
    %v1450 = vunpack.c.l.b16 %v1410
    %v1451 = vunpack.c.l.b16 %v1411
    %v1452 = vunpack.c.l.b16 %v1412
    %v1453 = vunpack.c.l.b16 %v1413
    %v1454 = vunpack.c.l.b16 %v1414
    %v1455 = vpack.c.b16 %v1440, %v1439
    %v1456 = vpack.c.b16 %v1442, %v1441
    %v1457 = vpack.c.b16 %v1444, %v1443
    %v1458 = vpack.c.b16 %v1446, %v1445
    %v1459 = vpack.c.b16 %v1448, %v1447
    %v1460 = vpack.c.b16 %v1450, %v1449
    %v1461 = vpack.c.b16 %v1452, %v1451
    %v1462 = vpack.c.b16 %v1454, %v1453
    %1471 = vmatprep.subr.bf16.mxu0 0
    %1472 = vmatpush1.bf16.msra.mxu0 %v1455
    %1473 = vmatprep.subr.bf16.mxu0 0
    %1474 = vmatpush1.bf16.msra.mxu0 %v1456
    %1475 = vmatprep.subr.bf16.mxu0 0
    %1476 = vmatpush1.bf16.msra.mxu0 %v1457
    %1477 = vmatprep.subr.bf16.mxu0 0
    %1478 = vmatpush1.bf16.msra.mxu0 %v1458
    %1479 = vmatprep.subr.bf16.mxu0 0
    %1480 = vmatpush1.bf16.msra.mxu0 %v1459
    %1481 = vmatprep.subr.bf16.mxu0 0
    %1482 = vmatpush1.bf16.msra.mxu0 %v1460
    %1483 = vmatprep.subr.bf16.mxu0 0
    %1484 = vmatpush1.bf16.msra.mxu0 %v1461
    %1485 = vmatprep.subr.bf16.mxu0 0
    %1486 = vmatpush1.bf16.msra.mxu0 %v1462
    %1487 = vmatprep.subr.bf16.mxu0 0
    %1488 = vmatpush1.bf16.msra.mxu0 0
    %1489 = vmatprep.subr.bf16.mxu0 0
    %1490 = vmatpush1.bf16.msra.mxu0 0
    %1491 = vmatprep.subr.bf16.mxu0 0
    %1492 = vmatpush1.bf16.msra.mxu0 0
    %1493 = vmatprep.subr.bf16.mxu0 0
    %1494 = vmatpush1.bf16.msra.mxu0 0
    %1495 = vmatprep.subr.bf16.mxu0 0
    %1496 = vmatpush1.bf16.msra.mxu0 0
    %1497 = vmatprep.subr.bf16.mxu0 0
    %1498 = vmatpush1.bf16.msra.mxu0 0
    %1499 = vmatprep.subr.bf16.mxu0 0
    %1500 = vmatpush1.bf16.msra.mxu0 0
    %1501 = vmatprep.subr.bf16.mxu0 0
    %1502 = vmatpush1.bf16.msra.mxu0 0
    %1503 = vmatprep.mubr.bf16.mxu0 0
    %1504 = vmatmul.mubr.bf16.gmra.mrb[0].mxu0 %v1394
    %v1505 = vpop.f32.mrb[0].mxu0
    %v1506 = vadd.f32 %v1421, %v1505
    %v1507 = vpop.f32.mrb[0].mxu0
    %v1508 = vpop.f32.mrb[0].mxu0
    %v1509 = vadd.f32 %v1421, %v1508
    %v1510 = vpop.f32.mrb[0].mxu0
    %1511 = vmatprep.mubr.bf16.mxu0 0
    %1512 = vmatmul.mubr.bf16.gmra.mrb[0].mxu0 %v1395
    %v1513 = vpop.f32.mrb[0].mxu0
    %v1514 = vadd.f32 %v1421, %v1513
    %v1515 = vpop.f32.mrb[0].mxu0
    %v1516 = vpop.f32.mrb[0].mxu0
    %v1517 = vadd.f32 %v1421, %v1516
    %v1518 = vpop.f32.mrb[0].mxu0
    %1519 = vdwg.mxu0
    %v1520 = vmax.f32 %v1506, 0.0
    %v1521 = vmax.f32 %v1509, 0.0
    %v1522 = vmax.f32 %v1514, 0.0
    %v1523 = vmax.f32 %v1517, 0.0
    %1524 = vmatprep.subr.bf16.mxu0 0
    %1525 = vmatpush1.bf16.msra.mxu0 %v1455
    %1526 = vmatprep.subr.bf16.mxu0 0
    %1527 = vmatpush1.bf16.msra.mxu0 %v1456
    %1528 = vmatprep.subr.bf16.mxu0 0
    %1529 = vmatpush1.bf16.msra.mxu0 %v1457
    %1530 = vmatprep.subr.bf16.mxu0 0
    %1531 = vmatpush1.bf16.msra.mxu0 %v1458
    %1532 = vmatprep.subr.bf16.mxu0 0
    %1533 = vmatpush1.bf16.msra.mxu0 %v1459
    %1534 = vmatprep.subr.bf16.mxu0 0
    %1535 = vmatpush1.bf16.msra.mxu0 %v1460
    %1536 = vmatprep.subr.bf16.mxu0 0
    %1537 = vmatpush1.bf16.msra.mxu0 %v1461
    %1538 = vmatprep.subr.bf16.mxu0 0
    %1539 = vmatpush1.bf16.msra.mxu0 %v1462
    %1540 = vmatprep.subr.bf16.mxu0 0
    %1541 = vmatpush1.bf16.msra.mxu0 0
    %1542 = vmatprep.subr.bf16.mxu0 0
    %1543 = vmatpush1.bf16.msra.mxu0 0
    %1544 = vmatprep.subr.bf16.mxu0 0
    %1545 = vmatpush1.bf16.msra.mxu0 0
    %1546 = vmatprep.subr.bf16.mxu0 0
    %1547 = vmatpush1.bf16.msra.mxu0 0
    %1548 = vmatprep.subr.bf16.mxu0 0
    %1549 = vmatpush1.bf16.msra.mxu0 0
    %1550 = vmatprep.subr.bf16.mxu0 0
    %1551 = vmatpush1.bf16.msra.mxu0 0
    %1552 = vmatprep.subr.bf16.mxu0 0
    %1553 = vmatpush1.bf16.msra.mxu0 0
    %1554 = vmatprep.subr.bf16.mxu0 0
    %1555 = vmatpush1.bf16.msra.mxu0 0
    %1556 = vmatprep.mubr.bf16.mxu0 0
    %1557 = vmatmul.mubr.bf16.gmra.mrb[0].mxu0 %v1396
    %v1558 = vpop.f32.mrb[0].mxu0
    %v1559 = vadd.f32 %v1421, %v1558
    %v1560 = vpop.f32.mrb[0].mxu0
    %v1561 = vpop.f32.mrb[0].mxu0
    %v1562 = vadd.f32 %v1421, %v1561
    %v1563 = vpop.f32.mrb[0].mxu0
    %1564 = vmatprep.mubr.bf16.mxu0 0
    %1565 = vmatmul.mubr.bf16.gmra.mrb[0].mxu0 %v1397
    %v1566 = vpop.f32.mrb[0].mxu0
    %v1567 = vadd.f32 %v1421, %v1566
    %v1568 = vpop.f32.mrb[0].mxu0
    %v1569 = vpop.f32.mrb[0].mxu0
    %v1570 = vadd.f32 %v1421, %v1569
    %v1571 = vpop.f32.mrb[0].mxu0
    %1572 = vdwg.mxu0
    %v1573 = vmax.f32 %v1559, 0.0
    %v1574 = vmax.f32 %v1562, 0.0
    %v1575 = vmax.f32 %v1567, 0.0
    %v1576 = vmax.f32 %v1570, 0.0
    %1577 = vst [vmem:[%s3] sm:$0xff] %v1520
    %1578 = vst [vmem:[%s3 + $0x8] sm:$0xff] %v1521
    %1579 = vst [vmem:[%s3 + $0x10] sm:$0xff] %v1522
    %1580 = vst [vmem:[%s3 + $0x18] sm:$0xff] %v1523
    %1581 = vst [vmem:[%s3 + $0x20] sm:$0xff] %v1573
    %1582 = vst [vmem:[%s3 + $0x28] sm:$0xff] %v1574
    %1583 = vst [vmem:[%s3 + $0x30] sm:$0xff] %v1575
    %1584 = vst [vmem:[%s3 + $0x38] sm:$0xff] %v1576
    // Predicated region
    $region18: #{_mlp_forward_impl.1} parent=1 // pred_check
      _
    $region19: #{_mlp_forward_impl.1} parent=1 // pred_check_branch
      %1586 = sbr.rel (0) target = $region21
    $region20: #{_mlp_forward_impl.1} parent=1 // pred_region
      _
    $region21: #{_mlp_forward_impl.1} parent=1 // pred_fallthru
      _
    // Predicated region
    $region22: #{_mlp_forward_impl.1} parent=1 // pred_check
      _
    $region23: #{_mlp_forward_impl.1} parent=1 // pred_check_branch
      %1588 = sbr.rel (0) target = $region25
    $region24: #{_mlp_forward_impl.1} parent=1 // pred_region
      _
    $region25: #{_mlp_forward_impl.1} parent=1 // pred_fallthru
      _
    %1589 = vsyncpa [#allocation3], 1

</llo_original>
